<compile_context>
chip_gen: v7x
topology: tpu7x:2x2x1
jax: 0.10.0
libtpu: 0.0.40
codegen_flags: <defaults>
</compile_context>

<pallas_src>
import jax
import jax.numpy as jnp
from jax.experimental import pallas as pl
from jax.experimental.pallas import tpu as pltpu


def _round_up(x, m):
    return (x + m - 1) // m * m


def decoder_kernel(x_ref, h_ref, enc_ref,
                   w_in0_ref, w_ctx_ref, w_hh_ref,
                   b_ih_ref, b_hh_ref,
                   w_fc_ref, b_fc_ref,
                   out_ref, h_out_ref):
    Hp = h_ref.shape[1]

    hidden = h_ref[...]                              # (TB, Hp) f32
    hidden_bf = hidden.astype(jnp.bfloat16)
    enc = enc_ref[...]                               # (TB, S, Hp) bf16

    # ---- attention(hidden, encoder_outputs) on the MXU (batched matmuls) ----
    # scores[b, 0, s] = <hidden[b], enc[b, s]>
    scores = jnp.einsum("bqd,bsd->bqs", hidden_bf[:, None, :], enc,
                        preferred_element_type=jnp.float32)       # (TB, 1, S)
    scores = scores - jnp.max(scores, axis=-1, keepdims=True)
    e = jnp.exp(scores)
    attn = e * pl.reciprocal(jnp.sum(e, axis=-1, keepdims=True), approx=True)
    context = jnp.einsum("bqs,bsd->bqd", attn.astype(enc.dtype), enc,
                         preferred_element_type=jnp.float32)      # (TB, 1, Hp)
    context = context[:, 0, :]                                    # (TB, Hp) f32

    # ---- GRU cell, single step (PyTorch gate order r, z, n) ----
    # cat(input_, context) @ W_ih^T is split:
    #   scalar column  -> VPU broadcast multiply (avoids a K=1 MXU matmul)
    #   context block  -> one (TB,Hp)@(Hp,3Hp) bf16 MXU matmul, f32 accumulate
    x_scalar = x_ref[...]                                         # (TB, 1) f32
    gi = (x_scalar * w_in0_ref[...]
          + jnp.dot(context.astype(jnp.bfloat16), w_ctx_ref[...],
                    preferred_element_type=jnp.float32)
          + b_ih_ref[...])                                        # (TB, 3Hp)
    gh = (jnp.dot(hidden_bf, w_hh_ref[...],
                  preferred_element_type=jnp.float32)
          + b_hh_ref[...])                                        # (TB, 3Hp)

    # Hp is a multiple of 128, so gate slices are lane-aligned (free views).
    r = jax.nn.sigmoid(gi[:, 0:Hp] + gh[:, 0:Hp])
    z = jax.nn.sigmoid(gi[:, Hp:2 * Hp] + gh[:, Hp:2 * Hp])
    n = jnp.tanh(gi[:, 2 * Hp:3 * Hp] + r * gh[:, 2 * Hp:3 * Hp])
    h_new = (1.0 - z) * n + z * hidden                            # (TB, Hp) f32

    # ---- fc + log_softmax (padded output columns carry bias -1e30) ----
    logits = (jnp.dot(h_new.astype(jnp.bfloat16), w_fc_ref[...],
                      preferred_element_type=jnp.float32)
              + b_fc_ref[...])                                    # (TB, Op)
    m = jnp.max(logits, axis=-1, keepdims=True)
    lse = jnp.log(jnp.sum(jnp.exp(logits - m), axis=-1, keepdims=True)) + m
    out_ref[...] = logits - lse
    h_out_ref[...] = h_new


def prepare_params(params, hidden_dim, output_dim):
    """One-time weight repack (hoisted out of the per-step decode path):
    transpose, per-gate 128-lane padding, bf16 cast of matmul operands."""
    H, O = hidden_dim, output_dim
    Hp = _round_up(H, 128)
    Op = _round_up(O, 128)

    w_ih = params["w_ih"].astype(jnp.float32)    # (3H, H+1), col 0 = scalar input
    w_hh = params["w_hh"].astype(jnp.float32)    # (3H, H)
    b_ih = params["b_ih"].astype(jnp.float32)
    b_hh = params["b_hh"].astype(jnp.float32)
    w_fc = params["w_fc"].astype(jnp.float32)    # (O, H)
    b_fc = params["b_fc"].astype(jnp.float32)

    w_in0 = jnp.zeros((1, 3 * Hp), jnp.float32)
    w_ctx = jnp.zeros((Hp, 3 * Hp), jnp.bfloat16)
    w_hh_t = jnp.zeros((Hp, 3 * Hp), jnp.bfloat16)
    b_ih_p = jnp.zeros((1, 3 * Hp), jnp.float32)
    b_hh_p = jnp.zeros((1, 3 * Hp), jnp.float32)
    for g in range(3):
        rows = slice(g * H, (g + 1) * H)
        cols = slice(g * Hp, g * Hp + H)
        w_in0 = w_in0.at[0, cols].set(w_ih[rows, 0])
        w_ctx = w_ctx.at[:H, cols].set(w_ih[rows, 1:].T.astype(jnp.bfloat16))
        w_hh_t = w_hh_t.at[:H, cols].set(w_hh[rows, :].T.astype(jnp.bfloat16))
        b_ih_p = b_ih_p.at[0, cols].set(b_ih[rows])
        b_hh_p = b_hh_p.at[0, cols].set(b_hh[rows])

    w_fc_t = jnp.zeros((Hp, Op), jnp.bfloat16).at[:H, :O].set(
        w_fc.T.astype(jnp.bfloat16))
    # padded logit columns get a huge negative bias -> vanish under log_softmax
    b_fc_p = jnp.full((1, Op), -1e30, jnp.float32).at[0, :O].set(b_fc)

    return {
        "w_in0": w_in0, "w_ctx": w_ctx, "w_hh_t": w_hh_t,
        "b_ih": b_ih_p, "b_hh": b_hh_p,
        "w_fc_t": w_fc_t, "b_fc": b_fc_p,
    }


def decoder_forward(input_, hidden, encoder_outputs, prepped, output_dim):
    """input_: (B,1,1); hidden: (1,B,H); encoder_outputs: (B,S,H)."""
    B, S, H = encoder_outputs.shape
    Hp = prepped["w_hh_t"].shape[0]
    Op = prepped["w_fc_t"].shape[1]
    O = output_dim

    # Grid over the batch dimension; weights stay resident across grid steps.
    if B <= 128:
        TB = _round_up(B, 8)
        Bp = TB
    else:
        TB = 128
        Bp = _round_up(B, TB)

    x2d = jnp.zeros((Bp, 1), jnp.float32).at[:B].set(
        input_.reshape(B, 1).astype(jnp.float32))
    h2d = jnp.zeros((Bp, Hp), jnp.float32).at[:B, :H].set(
        hidden.reshape(B, H).astype(jnp.float32))
    enc = jnp.zeros((Bp, S, Hp), jnp.bfloat16).at[:B, :, :H].set(
        encoder_outputs.astype(jnp.bfloat16))

    batch2 = lambda shape: pl.BlockSpec(shape, lambda b: (b, 0))
    resident = lambda shape: pl.BlockSpec(shape, lambda b: (0,) * len(shape))

    out_p, hid_p = pl.pallas_call(
        decoder_kernel,
        out_shape=(jax.ShapeDtypeStruct((Bp, Op), jnp.float32),
                   jax.ShapeDtypeStruct((Bp, Hp), jnp.float32)),
        grid=(Bp // TB,),
        in_specs=[
            batch2((TB, 1)),                                 # input_
            batch2((TB, Hp)),                                # hidden
            pl.BlockSpec((TB, S, Hp), lambda b: (b, 0, 0)),  # encoder_outputs
            resident((1, 3 * Hp)),                           # w_ih scalar column
            resident((Hp, 3 * Hp)),                          # w_ih context block^T
            resident((Hp, 3 * Hp)),                          # w_hh^T
            resident((1, 3 * Hp)),                           # b_ih
            resident((1, 3 * Hp)),                           # b_hh
            resident((Hp, Op)),                              # w_fc^T
            resident((1, Op)),                               # b_fc
        ],
        out_specs=(batch2((TB, Op)), batch2((TB, Hp))),
        input_output_aliases={1: 1},                         # hidden in -> hidden out
        compiler_params=pltpu.CompilerParams(
            dimension_semantics=("parallel",)),
    )(x2d, h2d, enc,
      prepped["w_in0"], prepped["w_ctx"], prepped["w_hh_t"],
      prepped["b_ih"], prepped["b_hh"],
      prepped["w_fc_t"], prepped["b_fc"])

    # PyTorch returns (log_softmax output (B, O), hidden (1, B, H))
    out = out_p[:B, :O]
    h_new = hid_p[:B, :H].reshape(1, B, H)
    return out, h_new


def reference_forward(input_, hidden, encoder_outputs, params):
    """Pure-JAX f32 reference with identical semantics (for verification)."""
    B, S, H = encoder_outputs.shape
    h = hidden.reshape(B, H)
    enc = encoder_outputs
    scores = jnp.einsum("bd,bsd->bs", h, enc)
    attn = jax.nn.softmax(scores, axis=-1)
    context = jnp.einsum("bs,bsd->bd", attn, enc)
    x = jnp.concatenate([input_.reshape(B, 1), context], axis=1)   # (B, H+1)
    gi = x @ params["w_ih"].T + params["b_ih"]
    gh = h @ params["w_hh"].T + params["b_hh"]
    r = jax.nn.sigmoid(gi[:, 0:H] + gh[:, 0:H])
    z = jax.nn.sigmoid(gi[:, H:2 * H] + gh[:, H:2 * H])
    n = jnp.tanh(gi[:, 2 * H:] + r * gh[:, 2 * H:])
    h_new = (1.0 - z) * n + z * h
    logits = h_new @ params["w_fc"].T + params["b_fc"]
    return jax.nn.log_softmax(logits, axis=1), h_new.reshape(1, B, H)


def init_params(key, hidden_dim, output_dim):
    """Deterministic PyTorch-style uniform init for GRU + Linear."""
    ks = jax.random.split(key, 6)
    kg = 1.0 / jnp.sqrt(hidden_dim)
    kf = 1.0 / jnp.sqrt(hidden_dim)
    u = lambda k, shape, lim: jax.random.uniform(
        k, shape, jnp.float32, minval=-lim, maxval=lim)
    return {
        "w_ih": u(ks[0], (3 * hidden_dim, hidden_dim + 1), kg),
        "w_hh": u(ks[1], (3 * hidden_dim, hidden_dim), kg),
        "b_ih": u(ks[2], (3 * hidden_dim,), kg),
        "b_hh": u(ks[3], (3 * hidden_dim,), kg),
        "w_fc": u(ks[4], (output_dim, hidden_dim), kf),
        "b_fc": u(ks[5], (output_dim,), kf),
    }


if __name__ == "__main__":
    B, S, H, O = 2, 8, 32, 16
    key = jax.random.PRNGKey(0)
    k_in, k_hid, k_enc, k_par = jax.random.split(key, 4)

    input_ = jax.random.normal(k_in, (B, 1, 1), jnp.float32)        # scalar decoder input
    hidden = jax.random.normal(k_hid, (1, B, H), jnp.float32)       # (num_layers, B, H)
    encoder_outputs = jax.random.normal(k_enc, (B, S, H), jnp.float32)
    params = init_params(k_par, H, O)

    # Weight repack happens once per model, outside the per-step decode path.
    prepped = prepare_params(params, H, O)

    out, h_new = decoder_forward(input_, hidden, encoder_outputs, prepped, O)
    out = jax.block_until_ready(out)
    h_new = jax.block_until_ready(h_new)

    ref_out, ref_h = reference_forward(input_, hidden, encoder_outputs, params)
    assert out.shape == (B, O) and h_new.shape == (1, B, H)
    # bf16 matmul operands (MXU) + approx reciprocal -> loose tolerance vs the
    # full-f32 reference; semantics are identical.
    assert jnp.allclose(out, ref_out, atol=1e-1, rtol=1e-1)
    assert jnp.allclose(h_new, ref_h, atol=1e-1, rtol=1e-1)

    print("KERNEL_OK")
</pallas_src>

<mosaic_0001>
module attributes {stable_mosaic.version = 11 : i64} {
  func.func @decoder_kernel(%arg0: i32, %arg1: memref<8x1xf32, #tpu.memory_space<vmem>>, %arg2: memref<8x128xf32, #tpu.memory_space<vmem>>, %arg3: memref<8x8x128xbf16, #tpu.memory_space<vmem>>, %arg4: memref<1x384xf32, #tpu.memory_space<vmem>>, %arg5: memref<128x384xbf16, #tpu.memory_space<vmem>>, %arg6: memref<128x384xbf16, #tpu.memory_space<vmem>>, %arg7: memref<1x384xf32, #tpu.memory_space<vmem>>, %arg8: memref<1x384xf32, #tpu.memory_space<vmem>>, %arg9: memref<128x128xbf16, #tpu.memory_space<vmem>>, %arg10: memref<1x128xf32, #tpu.memory_space<vmem>>, %arg11: memref<8x128xf32, #tpu.memory_space<vmem>>, %arg12: memref<8x128xf32, #tpu.memory_space<vmem>>) attributes {dimension_semantics = [#tpu.dimension_semantics<parallel>], iteration_bounds = array<i64: 1>, scalar_prefetch = 0 : i64, scratch_operands = 0 : i64, tpu.core_type = #tpu.core_type<tc>, window_params = [{transform_indices = @transform_0, window_bounds = array<i64: 8, 1>}, {transform_indices = @transform_1, window_bounds = array<i64: 8, 128>}, {transform_indices = @transform_2, window_bounds = array<i64: 8, 8, 128>}, {pipeline_mode = #tpu.pipeline_mode<synchronous>, transform_indices = @transform_3, window_bounds = array<i64: 1, 384>}, {pipeline_mode = #tpu.pipeline_mode<synchronous>, transform_indices = @transform_4, window_bounds = array<i64: 128, 384>}, {pipeline_mode = #tpu.pipeline_mode<synchronous>, transform_indices = @transform_5, window_bounds = array<i64: 128, 384>}, {pipeline_mode = #tpu.pipeline_mode<synchronous>, transform_indices = @transform_6, window_bounds = array<i64: 1, 384>}, {pipeline_mode = #tpu.pipeline_mode<synchronous>, transform_indices = @transform_7, window_bounds = array<i64: 1, 384>}, {pipeline_mode = #tpu.pipeline_mode<synchronous>, transform_indices = @transform_8, window_bounds = array<i64: 128, 128>}, {pipeline_mode = #tpu.pipeline_mode<synchronous>, transform_indices = @transform_9, window_bounds = array<i64: 1, 128>}, {transform_indices = @transform_10, window_bounds = array<i64: 8, 128>}, {transform_indices = @transform_11, window_bounds = array<i64: 8, 128>}]} {
    %c0 = arith.constant 0 : index
    %c0_0 = arith.constant 0 : index
    %0 = vector.load %arg2[%c0, %c0_0] : memref<8x128xf32, #tpu.memory_space<vmem>>, vector<8x128xf32>
    %1 = arith.truncf %0 : vector<8x128xf32> to vector<8x128xbf16>
    %c0_1 = arith.constant 0 : index
    %c0_2 = arith.constant 0 : index
    %c0_3 = arith.constant 0 : index
    %2 = vector.load %arg3[%c0_1, %c0_2, %c0_3] : memref<8x8x128xbf16, #tpu.memory_space<vmem>>, vector<8x8x128xbf16>
    %3 = vector.shape_cast %1 : vector<8x128xbf16> to vector<8x1x128xbf16>
    "tpu.trace_start"() <{level = 10 : i32, message = "bqd,bsd->bqs"}> : () -> ()
    %cst = arith.constant dense<0.000000e+00> : vector<8x1x8xf32>
    %4 = tpu.matmul %3, %2, %cst {dimension_numbers = #tpu.dot_dimension_numbers<[2], [2], [1], [1], [0, 0, 0, 1, 1, 1], [0], [0]>} : vector<8x1x128xbf16>, vector<8x8x128xbf16>, vector<8x1x8xf32> -> vector<8x1x8xf32>
    "tpu.trace_stop"() : () -> ()
    %cst_4 = arith.constant dense<0xFF800000> : vector<8x1xf32>
    %5 = vector.multi_reduction <maximumf>, %4, %cst_4 [2] : vector<8x1x8xf32> to vector<8x1xf32>
    %6 = vector.shape_cast %5 : vector<8x1xf32> to vector<8x1x1xf32>
    %7 = vector.broadcast %6 : vector<8x1x1xf32> to vector<8x1x8xf32>
    %8 = arith.subf %4, %7 : vector<8x1x8xf32>
    %9 = math.exp %8 : vector<8x1x8xf32>
    %cst_5 = arith.constant dense<0.000000e+00> : vector<8x1xf32>
    %10 = vector.multi_reduction <add>, %9, %cst_5 [2] : vector<8x1x8xf32> to vector<8x1xf32>
    %11 = vector.shape_cast %10 : vector<8x1xf32> to vector<8x1x1xf32>
    %12 = tpu.reciprocal %11 {approx = true} : vector<8x1x1xf32> -> vector<8x1x1xf32>
    %13 = vector.broadcast %12 : vector<8x1x1xf32> to vector<8x1x8xf32>
    %14 = arith.mulf %9, %13 : vector<8x1x8xf32>
    %15 = arith.truncf %14 : vector<8x1x8xf32> to vector<8x1x8xbf16>
    "tpu.trace_start"() <{level = 10 : i32, message = "bqs,bsd->bqd"}> : () -> ()
    %cst_6 = arith.constant dense<0.000000e+00> : vector<8x1x128xf32>
    %16 = tpu.matmul %15, %2, %cst_6 {dimension_numbers = #tpu.dot_dimension_numbers<[2], [1], [1], [2], [0, 0, 0, 1, 1, 2], [0], [0]>} : vector<8x1x8xbf16>, vector<8x8x128xbf16>, vector<8x1x128xf32> -> vector<8x1x128xf32>
    "tpu.trace_stop"() : () -> ()
    %17 = vector.shape_cast %16 : vector<8x1x128xf32> to vector<8x128xf32>
    %c0_7 = arith.constant 0 : index
    %c0_8 = arith.constant 0 : index
    %18 = vector.load %arg1[%c0_7, %c0_8] : memref<8x1xf32, #tpu.memory_space<vmem>>, vector<8x1xf32>
    %c0_9 = arith.constant 0 : index
    %c0_10 = arith.constant 0 : index
    %19 = vector.load %arg4[%c0_9, %c0_10] : memref<1x384xf32, #tpu.memory_space<vmem>>, vector<1x384xf32>
    %20 = vector.broadcast %18 : vector<8x1xf32> to vector<8x384xf32>
    %21 = vector.broadcast %19 : vector<1x384xf32> to vector<8x384xf32>
    %22 = arith.mulf %20, %21 : vector<8x384xf32>
    %23 = arith.truncf %17 : vector<8x128xf32> to vector<8x128xbf16>
    %c0_11 = arith.constant 0 : index
    %c0_12 = arith.constant 0 : index
    %24 = vector.load %arg5[%c0_11, %c0_12] : memref<128x384xbf16, #tpu.memory_space<vmem>>, vector<128x384xbf16>
    %cst_13 = arith.constant dense<0.000000e+00> : vector<8x384xf32>
    %25 = tpu.matmul %23, %24, %cst_13 {dimension_numbers = #tpu.dot_dimension_numbers<[1], [0], [0], [1], [0, 0, 1, 1], [], []>} : vector<8x128xbf16>, vector<128x384xbf16>, vector<8x384xf32> -> vector<8x384xf32>
    %26 = arith.addf %22, %25 : vector<8x384xf32>
    %c0_14 = arith.constant 0 : index
    %c0_15 = arith.constant 0 : index
    %27 = vector.load %arg7[%c0_14, %c0_15] : memref<1x384xf32, #tpu.memory_space<vmem>>, vector<1x384xf32>
    %28 = vector.broadcast %27 : vector<1x384xf32> to vector<8x384xf32>
    %29 = arith.addf %26, %28 : vector<8x384xf32>
    %c0_16 = arith.constant 0 : index
    %c0_17 = arith.constant 0 : index
    %30 = vector.load %arg6[%c0_16, %c0_17] : memref<128x384xbf16, #tpu.memory_space<vmem>>, vector<128x384xbf16>
    %cst_18 = arith.constant dense<0.000000e+00> : vector<8x384xf32>
    %31 = tpu.matmul %1, %30, %cst_18 {dimension_numbers = #tpu.dot_dimension_numbers<[1], [0], [0], [1], [0, 0, 1, 1], [], []>} : vector<8x128xbf16>, vector<128x384xbf16>, vector<8x384xf32> -> vector<8x384xf32>
    %c0_19 = arith.constant 0 : index
    %c0_20 = arith.constant 0 : index
    %32 = vector.load %arg8[%c0_19, %c0_20] : memref<1x384xf32, #tpu.memory_space<vmem>>, vector<1x384xf32>
    %33 = vector.broadcast %32 : vector<1x384xf32> to vector<8x384xf32>
    %34 = arith.addf %31, %33 : vector<8x384xf32>
    %35 = vector.extract_strided_slice %29 {offsets = [0, 0], sizes = [8, 128], strides = [1, 1]} : vector<8x384xf32> to vector<8x128xf32>
    %36 = vector.extract_strided_slice %34 {offsets = [0, 0], sizes = [8, 128], strides = [1, 1]} : vector<8x384xf32> to vector<8x128xf32>
    %37 = arith.addf %35, %36 : vector<8x128xf32>
    %38 = arith.negf %37 : vector<8x128xf32>
    %39 = math.exp %38 : vector<8x128xf32>
    %cst_21 = arith.constant 1.000000e+00 : f32
    %40 = vector.broadcast %cst_21 : f32 to vector<8x128xf32>
    %41 = arith.addf %40, %39 : vector<8x128xf32>
    %42 = arith.divf %40, %41 : vector<8x128xf32>
    %43 = vector.extract_strided_slice %29 {offsets = [0, 128], sizes = [8, 128], strides = [1, 1]} : vector<8x384xf32> to vector<8x128xf32>
    %44 = vector.extract_strided_slice %34 {offsets = [0, 128], sizes = [8, 128], strides = [1, 1]} : vector<8x384xf32> to vector<8x128xf32>
    %45 = arith.addf %43, %44 : vector<8x128xf32>
    %46 = arith.negf %45 : vector<8x128xf32>
    %47 = math.exp %46 : vector<8x128xf32>
    %cst_22 = arith.constant 1.000000e+00 : f32
    %48 = vector.broadcast %cst_22 : f32 to vector<8x128xf32>
    %49 = arith.addf %48, %47 : vector<8x128xf32>
    %50 = arith.divf %48, %49 : vector<8x128xf32>
    %51 = vector.extract_strided_slice %29 {offsets = [0, 256], sizes = [8, 128], strides = [1, 1]} : vector<8x384xf32> to vector<8x128xf32>
    %52 = vector.extract_strided_slice %34 {offsets = [0, 256], sizes = [8, 128], strides = [1, 1]} : vector<8x384xf32> to vector<8x128xf32>
    %53 = arith.mulf %42, %52 : vector<8x128xf32>
    %54 = arith.addf %51, %53 : vector<8x128xf32>
    %55 = math.tanh %54 : vector<8x128xf32>
    %cst_23 = arith.constant 1.000000e+00 : f32
    %56 = vector.broadcast %cst_23 : f32 to vector<8x128xf32>
    %57 = arith.subf %56, %50 : vector<8x128xf32>
    %58 = arith.mulf %57, %55 : vector<8x128xf32>
    %59 = arith.mulf %50, %0 : vector<8x128xf32>
    %60 = arith.addf %58, %59 : vector<8x128xf32>
    %61 = arith.truncf %60 : vector<8x128xf32> to vector<8x128xbf16>
    %c0_24 = arith.constant 0 : index
    %c0_25 = arith.constant 0 : index
    %62 = vector.load %arg9[%c0_24, %c0_25] : memref<128x128xbf16, #tpu.memory_space<vmem>>, vector<128x128xbf16>
    %cst_26 = arith.constant dense<0.000000e+00> : vector<8x128xf32>
    %63 = tpu.matmul %61, %62, %cst_26 {dimension_numbers = #tpu.dot_dimension_numbers<[1], [0], [0], [1], [0, 0, 1, 1], [], []>} : vector<8x128xbf16>, vector<128x128xbf16>, vector<8x128xf32> -> vector<8x128xf32>
    %c0_27 = arith.constant 0 : index
    %c0_28 = arith.constant 0 : index
    %64 = vector.load %arg10[%c0_27, %c0_28] : memref<1x128xf32, #tpu.memory_space<vmem>>, vector<1x128xf32>
    %65 = vector.broadcast %64 : vector<1x128xf32> to vector<8x128xf32>
    %66 = arith.addf %63, %65 : vector<8x128xf32>
    %cst_29 = arith.constant dense<0xFF800000> : vector<8xf32>
    %67 = vector.multi_reduction <maximumf>, %66, %cst_29 [1] : vector<8x128xf32> to vector<8xf32>
    %68 = vector.shape_cast %67 : vector<8xf32> to vector<8x1xf32>
    %69 = vector.broadcast %68 : vector<8x1xf32> to vector<8x128xf32>
    %70 = arith.subf %66, %69 : vector<8x128xf32>
    %71 = math.exp %70 : vector<8x128xf32>
    %cst_30 = arith.constant dense<0.000000e+00> : vector<8xf32>
    %72 = vector.multi_reduction <add>, %71, %cst_30 [1] : vector<8x128xf32> to vector<8xf32>
    %73 = vector.shape_cast %72 : vector<8xf32> to vector<8x1xf32>
    %74 = math.log %73 : vector<8x1xf32>
    %75 = arith.addf %74, %68 : vector<8x1xf32>
    %76 = vector.broadcast %75 : vector<8x1xf32> to vector<8x128xf32>
    %77 = arith.subf %66, %76 : vector<8x128xf32>
    %c0_31 = arith.constant 0 : index
    %c0_32 = arith.constant 0 : index
    %78 = vector.load %arg11[%c0_31, %c0_32] : memref<8x128xf32, #tpu.memory_space<vmem>>, vector<8x128xf32>
    tpu.vector_store %arg11[%c0_31, %c0_32], %77 {strides = array<i32>} : memref<8x128xf32, #tpu.memory_space<vmem>>, vector<8x128xf32>,
    %c0_33 = arith.constant 0 : index
    %c0_34 = arith.constant 0 : index
    %79 = vector.load %arg12[%c0_33, %c0_34] : memref<8x128xf32, #tpu.memory_space<vmem>>, vector<8x128xf32>
    tpu.vector_store %arg12[%c0_33, %c0_34], %60 {strides = array<i32>} : memref<8x128xf32, #tpu.memory_space<vmem>>, vector<8x128xf32>,
    return
  }
  func.func @transform_0(%arg0: i32) -> (i32, i32) {
    %c0_i32 = arith.constant 0 : i32
    %c0_i32_0 = arith.constant 0 : i32
    return %arg0, %c0_i32 : i32, i32
  }
  func.func @transform_1(%arg0: i32) -> (i32, i32) {
    %c0_i32 = arith.constant 0 : i32
    %c0_i32_0 = arith.constant 0 : i32
    return %arg0, %c0_i32 : i32, i32
  }
  func.func @transform_2(%arg0: i32) -> (i32, i32, i32) {
    %c0_i32 = arith.constant 0 : i32
    %c0_i32_0 = arith.constant 0 : i32
    %c0_i32_1 = arith.constant 0 : i32
    return %arg0, %c0_i32, %c0_i32_0 : i32, i32, i32
  }
  func.func @transform_3(%arg0: i32) -> (i32, i32) {
    %c0_i32 = arith.constant 0 : i32
    %c0_i32_0 = arith.constant 0 : i32
    %c0_i32_1 = arith.constant 0 : i32
    return %c0_i32, %c0_i32_0 : i32, i32
  }
  func.func @transform_4(%arg0: i32) -> (i32, i32) {
    %c0_i32 = arith.constant 0 : i32
    %c0_i32_0 = arith.constant 0 : i32
    %c0_i32_1 = arith.constant 0 : i32
    return %c0_i32, %c0_i32_0 : i32, i32
  }
  func.func @transform_5(%arg0: i32) -> (i32, i32) {
    %c0_i32 = arith.constant 0 : i32
    %c0_i32_0 = arith.constant 0 : i32
    %c0_i32_1 = arith.constant 0 : i32
    return %c0_i32, %c0_i32_0 : i32, i32
  }
  func.func @transform_6(%arg0: i32) -> (i32, i32) {
    %c0_i32 = arith.constant 0 : i32
    %c0_i32_0 = arith.constant 0 : i32
    %c0_i32_1 = arith.constant 0 : i32
    return %c0_i32, %c0_i32_0 : i32, i32
  }
  func.func @transform_7(%arg0: i32) -> (i32, i32) {
    %c0_i32 = arith.constant 0 : i32
    %c0_i32_0 = arith.constant 0 : i32
    %c0_i32_1 = arith.constant 0 : i32
    return %c0_i32, %c0_i32_0 : i32, i32
  }
  func.func @transform_8(%arg0: i32) -> (i32, i32) {
    %c0_i32 = arith.constant 0 : i32
    %c0_i32_0 = arith.constant 0 : i32
    %c0_i32_1 = arith.constant 0 : i32
    return %c0_i32, %c0_i32_0 : i32, i32
  }
  func.func @transform_9(%arg0: i32) -> (i32, i32) {
    %c0_i32 = arith.constant 0 : i32
    %c0_i32_0 = arith.constant 0 : i32
    %c0_i32_1 = arith.constant 0 : i32
    return %c0_i32, %c0_i32_0 : i32, i32
  }
  func.func @transform_10(%arg0: i32) -> (i32, i32) {
    %c0_i32 = arith.constant 0 : i32
    %c0_i32_0 = arith.constant 0 : i32
    return %arg0, %c0_i32 : i32, i32
  }
  func.func @transform_11(%arg0: i32) -> (i32, i32) {
    %c0_i32 = arith.constant 0 : i32
    %c0_i32_0 = arith.constant 0 : i32
    return %arg0, %c0_i32 : i32, i32
  }
}

</mosaic_0001>

<llo_original>
// kernel: tpu_custom_call.1
$region0: #{tpu_custom_call.1}
  #allocation0 [shape = 'u32[]', space=smem, size = 0x4, offset = 0x4, fixed_abs, tag = 'smem constant byte address 0x4 - core index']
  #allocation1 [shape = 'u32[144,128]{1,0:T(1,128)}', space=vmem, size = 0x12000, scoped, tag = 'internal scratch']
  %s0 = inlined_call_operand.vmem [shape: f32[8,1], index: 0, kind: input, shape index: {}]
  %s1 = inlined_call_operand.hbm [shape: f32[8,128], index: 1, kind: input, shape index: {}, may-alias: {1,11}]
  %s2 = inlined_call_operand.vmem [shape: bf16[8,8,128], index: 2, kind: input, shape index: {}]
  %s3 = inlined_call_operand.vmem [shape: f32[1,384], index: 3, kind: input, shape index: {}]
  %s4 = inlined_call_operand.hbm [shape: bf16[128,384], index: 4, kind: input, shape index: {}]
  %s5 = inlined_call_operand.hbm [shape: bf16[128,384], index: 5, kind: input, shape index: {}]
  %s6 = inlined_call_operand.vmem [shape: f32[1,384], index: 6, kind: input, shape index: {}]
  %s7 = inlined_call_operand.vmem [shape: f32[1,384], index: 7, kind: input, shape index: {}]
  %s8 = inlined_call_operand.hbm [shape: bf16[128,128], index: 8, kind: input, shape index: {}]
  %s9 = inlined_call_operand.vmem [shape: f32[1,128], index: 9, kind: input, shape index: {}]
  %s10 = inlined_call_operand.hbm [shape: f32[8,128], index: 10, kind: output, shape index: {0}]
  %s11 = inlined_call_operand.hbm [shape: f32[8,128], index: 11, kind: output, shape index: {1}, may-alias: {1,11}]
  %12 = xla_tuple %s10, %s11
  %s13 = sld [smem:[#allocation0]]
  $region74: #{tpu_custom_call.1} parent=0
    _
  %s15 = ssub.s32 1, %s13
  %s16 = scalar_select 0, %s15, %s13
  $region1: #{tpu_custom_call.1} parent=0
    #allocation2 [shape = 'u8[4096]{0}', space=vmem, size = 0x1000, scoped, tag = 'input window, operand 1, single buffered']
    #allocation3 [shape = 's32[1]{0}', space=sflag, size = 0x4, scoped, tag = 'scoped memory for tpu_custom_call.1']
    #allocation4 [shape = 's32[1]{0}', space=sflag, size = 0x4, scoped, tag = 'scoped memory for tpu_custom_call.1']
    #allocation5 [shape = 'u8[98304]{0}', space=vmem, size = 0x18000, scoped, tag = 'input window, operand 4, single buffered']
    #allocation6 [shape = 's32[1]{0}', space=sflag, size = 0x4, scoped, tag = 'scoped memory for tpu_custom_call.1']
    #allocation7 [shape = 'u8[98304]{0}', space=vmem, size = 0x18000, scoped, tag = 'input window, operand 5, single buffered']
    #allocation8 [shape = 'u8[32768]{0}', space=vmem, size = 0x8000, scoped, tag = 'input window, operand 8, single buffered']
    #allocation9 [shape = 's32[1]{0}', space=sflag, size = 0x4, scoped, tag = 'scoped memory for tpu_custom_call.1']
    #allocation10 [shape = 'u8[4096]{0}', space=vmem, size = 0x1000, scoped, tag = 'output window, operand 0, single buffered']
    #allocation11 [shape = 'u8[4096]{0}', space=vmem, size = 0x1000, scoped, tag = 'output window, operand 1, single buffered']
    #allocation12 [shape = 's32[1]{0}', space=sflag, size = 0x4, scoped, tag = 'scoped memory for tpu_custom_call.1']
    %17 = vsyncpa [#allocation3], 0
    %18 = vsyncpa [#allocation6], 0
    %19 = vsyncpa [#allocation9], 0
    %20 = vsyncpa [#allocation4], 0
    %21 = vsyncpa [#allocation12], 0
    // Predicated region
    $region2: #{tpu_custom_call.1} parent=1 // pred_check
      _
    $region3: #{tpu_custom_call.1} parent=1 // pred_check_branch
      %23 = sbr.rel (0) target = $region5
    $region4: #{tpu_custom_call.1} parent=1 // pred_region
      _
    $region5: #{tpu_custom_call.1} parent=1 // pred_fallthru
      _
    // Predicated region
    $region6: #{tpu_custom_call.1} parent=1 // pred_check
      _
    $region7: #{tpu_custom_call.1} parent=1 // pred_check_branch
      %25 = sbr.rel (0) target = $region9
    $region8: #{tpu_custom_call.1} parent=1 // pred_region
      %s27 = ssub.s32 128, 128
      %28 = vsyncadd [#allocation3], %s27
      %s30 = sshll.u32 [#allocation2], 4
      %s31 = int_to_ptr.vmem [resolvable:$true] %s30
      %33 = dma.hbm_to_vmem [thread:$0]  %s1, 128, %s31, [#allocation3]
    $region9: #{tpu_custom_call.1} parent=1 // pred_fallthru
      _
    // Predicated region
    $region10: #{tpu_custom_call.1} parent=1 // pred_check
      _
    $region11: #{tpu_custom_call.1} parent=1 // pred_check_branch
      %35 = sbr.rel (0) target = $region13
    $region12: #{tpu_custom_call.1} parent=1 // pred_region
      _
    $region13: #{tpu_custom_call.1} parent=1 // pred_fallthru
      _
    // Predicated region
    $region14: #{tpu_custom_call.1} parent=1 // pred_check
      _
    $region15: #{tpu_custom_call.1} parent=1 // pred_check_branch
      %37 = sbr.rel (0) target = $region17
    $region16: #{tpu_custom_call.1} parent=1 // pred_region
      _
    $region17: #{tpu_custom_call.1} parent=1 // pred_fallthru
      _
    // Predicated region
    $region18: #{tpu_custom_call.1} parent=1 // pred_check
      _
    $region19: #{tpu_custom_call.1} parent=1 // pred_check_branch
      %39 = sbr.rel (0) target = $region21
    $region20: #{tpu_custom_call.1} parent=1 // pred_region
      %s41 = ssub.s32 3072, 3072
      %42 = vsyncadd [#allocation6], %s41
      %s43 = sshll.u32 [#allocation5], 4
      %s44 = int_to_ptr.vmem [resolvable:$true] %s43
      %49 = dma.hbm_to_vmem [thread:$0]  %s4, 3072, %s44, [#allocation6], 192, 192, 12
    $region21: #{tpu_custom_call.1} parent=1 // pred_fallthru
      _
    // Predicated region
    $region22: #{tpu_custom_call.1} parent=1 // pred_check
      _
    $region23: #{tpu_custom_call.1} parent=1 // pred_check_branch
      %51 = sbr.rel (0) target = $region25
    $region24: #{tpu_custom_call.1} parent=1 // pred_region
      %s53 = ssub.s32 3072, 3072
      %54 = vsyncadd [#allocation6], %s53
      %s55 = sshll.u32 [#allocation7], 4
      %s56 = int_to_ptr.vmem [resolvable:$true] %s55
      %61 = dma.hbm_to_vmem [thread:$0]  %s5, 3072, %s56, [#allocation6], 192, 192, 12
    $region25: #{tpu_custom_call.1} parent=1 // pred_fallthru
      _
    // Predicated region
    $region26: #{tpu_custom_call.1} parent=1 // pred_check
      _
    $region27: #{tpu_custom_call.1} parent=1 // pred_check_branch
      %63 = sbr.rel (0) target = $region29
    $region28: #{tpu_custom_call.1} parent=1 // pred_region
      _
    $region29: #{tpu_custom_call.1} parent=1 // pred_fallthru
      _
    // Predicated region
    $region30: #{tpu_custom_call.1} parent=1 // pred_check
      _
    $region31: #{tpu_custom_call.1} parent=1 // pred_check_branch
      %65 = sbr.rel (0) target = $region33
    $region32: #{tpu_custom_call.1} parent=1 // pred_region
      _
    $region33: #{tpu_custom_call.1} parent=1 // pred_fallthru
      _
    // Predicated region
    $region34: #{tpu_custom_call.1} parent=1 // pred_check
      _
    $region35: #{tpu_custom_call.1} parent=1 // pred_check_branch
      %67 = sbr.rel (0) target = $region37
    $region36: #{tpu_custom_call.1} parent=1 // pred_region
      %s69 = ssub.s32 1024, 1024
      %70 = vsyncadd [#allocation9], %s69
      %s71 = sshll.u32 [#allocation8], 4
      %s72 = int_to_ptr.vmem [resolvable:$true] %s71
      %77 = dma.hbm_to_vmem [thread:$0]  %s8, 1024, %s72, [#allocation9], 64, 64, 4
    $region37: #{tpu_custom_call.1} parent=1 // pred_fallthru
      _
    // Predicated region
    $region38: #{tpu_custom_call.1} parent=1 // pred_check
      _
    $region39: #{tpu_custom_call.1} parent=1 // pred_check_branch
      %79 = sbr.rel (0) target = $region41
    $region40: #{tpu_custom_call.1} parent=1 // pred_region
      _
    $region41: #{tpu_custom_call.1} parent=1 // pred_fallthru
      _
    // Predicated region
    $region42: #{tpu_custom_call.1} parent=1 // pred_check
      _
    $region43: #{tpu_custom_call.1} parent=1 // pred_check_branch
      %81 = sbr.rel (0) target = $region45
    $region44: #{tpu_custom_call.1} parent=1 // pred_region
      %82 = dma.done [#allocation3], 128
    $region45: #{tpu_custom_call.1} parent=1 // pred_fallthru
      _
    // Predicated region
    $region46: #{tpu_custom_call.1} parent=1 // pred_check
      _
    $region47: #{tpu_custom_call.1} parent=1 // pred_check_branch
      %84 = sbr.rel (0) target = $region49
    $region48: #{tpu_custom_call.1} parent=1 // pred_region
      %85 = dma.done [#allocation6], 3072
    $region49: #{tpu_custom_call.1} parent=1 // pred_fallthru
      _
    // Predicated region
    $region50: #{tpu_custom_call.1} parent=1 // pred_check
      _
    $region51: #{tpu_custom_call.1} parent=1 // pred_check_branch
      %87 = sbr.rel (0) target = $region53
    $region52: #{tpu_custom_call.1} parent=1 // pred_region
      %88 = dma.done [#allocation6], 3072
    $region53: #{tpu_custom_call.1} parent=1 // pred_fallthru
      _
    // Predicated region
    $region54: #{tpu_custom_call.1} parent=1 // pred_check
      _
    $region55: #{tpu_custom_call.1} parent=1 // pred_check_branch
      %90 = sbr.rel (0) target = $region57
    $region56: #{tpu_custom_call.1} parent=1 // pred_region
      %91 = dma.done [#allocation9], 1024
    $region57: #{tpu_custom_call.1} parent=1 // pred_fallthru
      _
    %v93 = vld [vmem:[#allocation2] sm:$0xff]
    %v94 = vpack.c.bf16 %v93, %v93
    %v95 = vld [vmem:[%s2] sm:$0xf]
    %v96 = vld [vmem:[%s2 + $0x4] sm:$0xf]
    %v97 = vld [vmem:[%s2 + $0x8] sm:$0xf]
    %v98 = vld [vmem:[%s2 + $0xc] sm:$0xf]
    %v99 = vld [vmem:[%s2 + $0x10] sm:$0xf]
    %v100 = vld [vmem:[%s2 + $0x14] sm:$0xf]
    %v101 = vld [vmem:[%s2 + $0x18] sm:$0xf]
    %v102 = vld [vmem:[%s2 + $0x1c] sm:$0xf]
    %v105 = vunpack.c.l.s4 1966171168
    %v106 = vunpack.c.0.s8 %v105
    %v107 = vlaneseq
    %v108 = vshrl.u32 %v107, 7
    %v109 = vsub.s32 %v106, %v108
    %v110 = vrot.slane %v94, %v109
    %v111 = vcombine.high %v110, %v110
    %v113 = vunpack.c.l.s4 1966171168
    %v114 = vunpack.c.0.s8 %v113
    %v115 = vlaneseq
    %v116 = vshrl.u32 %v115, 7
    %v117 = vsub.s32 %v114, %v116
    %v118 = vrot.slane %v110, %v117
    %v120 = vunpack.c.l.s4 1966171168
    %v121 = vunpack.c.0.s8 %v120
    %v122 = vlaneseq
    %v123 = vshrl.u32 %v122, 7
    %v124 = vsub.s32 %v121, %v123
    %v125 = vrot.slane %v111, %v124
    %v126 = vcombine.high %v118, %v118
    %v127 = vcombine.high %v125, %v125
    %v128 = vunpack.i.l.s16 %v118
    %v129 = vunpack.i.h.s16 %v118
    %v130 = vunpack.i.l.s16 %v125
    %v131 = vunpack.i.h.s16 %v125
    %v132 = vunpack.i.l.s16 %v126
    %v133 = vunpack.i.h.s16 %v126
    %v134 = vunpack.i.l.s16 %v127
    %v135 = vunpack.i.h.s16 %v127
    %v136 = vpack.i.b16 %v128, %v128
    %v137 = vlaneseq
    %v138 = vshrl.u32 %v137, 7
    %v139 = vsub.s32 0, %v138
    %v140 = vrot.slane %v136, %v139
    %142 = vmatprep.subr.bf16.mxu0 0
    %143 = vmatpush1.bf16.xpose.msra.mxu0 %v95
    %144 = vmatprep.subr.bf16.mxu0 0
    %145 = vmatpush1.bf16.xpose.msra.mxu0 0
    %146 = vmatprep.subr.bf16.mxu0 0
    %147 = vmatpush1.bf16.xpose.msra.mxu0 0
    %148 = vmatprep.subr.bf16.mxu0 0
    %149 = vmatpush1.bf16.xpose.msra.mxu0 0
    %150 = vmatprep.subr.bf16.mxu0 0
    %151 = vmatpush1.bf16.xpose.msra.mxu0 0
    %152 = vmatprep.subr.bf16.mxu0 0
    %153 = vmatpush1.bf16.xpose.msra.mxu0 0
    %154 = vmatprep.subr.bf16.mxu0 0
    %155 = vmatpush1.bf16.xpose.msra.mxu0 0
    %156 = vmatprep.subr.bf16.mxu0 0
    %157 = vmatpush1.bf16.xpose.msra.mxu0 0
    %158 = vmatprep.subr.bf16.mxu0 0
    %159 = vmatpush1.bf16.xpose.msra.mxu0 0
    %160 = vmatprep.subr.bf16.mxu0 0
    %161 = vmatpush1.bf16.xpose.msra.mxu0 0
    %162 = vmatprep.subr.bf16.mxu0 0
    %163 = vmatpush1.bf16.xpose.msra.mxu0 0
    %164 = vmatprep.subr.bf16.mxu0 0
    %165 = vmatpush1.bf16.xpose.msra.mxu0 0
    %166 = vmatprep.subr.bf16.mxu0 0
    %167 = vmatpush1.bf16.xpose.msra.mxu0 0
    %168 = vmatprep.subr.bf16.mxu0 0
    %169 = vmatpush1.bf16.xpose.msra.mxu0 0
    %170 = vmatprep.subr.bf16.mxu0 0
    %171 = vmatpush1.bf16.xpose.msra.mxu0 0
    %172 = vmatprep.subr.bf16.mxu0 0
    %173 = vmatpush1.bf16.xpose.msra.mxu0 0
    %174 = vmatprep.mubr.bf16.mxu0 0
    %175 = vmatmul.mubr.bf16.gmra.mrb[0].mxu0 %v140
    %v176 = vpop.f32.mrb[0].mxu0
    %v177 = vadd.f32 0.0, %v176
    %v178 = vpop.f32.mrb[0].mxu0
    %v179 = vpop.f32.mrb[0].mxu0
    %v180 = vpop.f32.mrb[0].mxu0
    %181 = vdwg.mxu0
    %v182 = vpack.i.b16 %v129, %v129
    %v183 = vlaneseq
    %v184 = vshrl.u32 %v183, 7
    %v185 = vsub.s32 0, %v184
    %v186 = vrot.slane %v182, %v185
    %188 = vmatprep.subr.bf16.mxu0 0
    %189 = vmatpush1.bf16.xpose.msra.mxu0 %v96
    %190 = vmatprep.subr.bf16.mxu0 0
    %191 = vmatpush1.bf16.xpose.msra.mxu0 0
    %192 = vmatprep.subr.bf16.mxu0 0
    %193 = vmatpush1.bf16.xpose.msra.mxu0 0
    %194 = vmatprep.subr.bf16.mxu0 0
    %195 = vmatpush1.bf16.xpose.msra.mxu0 0
    %196 = vmatprep.subr.bf16.mxu0 0
    %197 = vmatpush1.bf16.xpose.msra.mxu0 0
    %198 = vmatprep.subr.bf16.mxu0 0
    %199 = vmatpush1.bf16.xpose.msra.mxu0 0
    %200 = vmatprep.subr.bf16.mxu0 0
    %201 = vmatpush1.bf16.xpose.msra.mxu0 0
    %202 = vmatprep.subr.bf16.mxu0 0
    %203 = vmatpush1.bf16.xpose.msra.mxu0 0
    %204 = vmatprep.subr.bf16.mxu0 0
    %205 = vmatpush1.bf16.xpose.msra.mxu0 0
    %206 = vmatprep.subr.bf16.mxu0 0
    %207 = vmatpush1.bf16.xpose.msra.mxu0 0
    %208 = vmatprep.subr.bf16.mxu0 0
    %209 = vmatpush1.bf16.xpose.msra.mxu0 0
    %210 = vmatprep.subr.bf16.mxu0 0
    %211 = vmatpush1.bf16.xpose.msra.mxu0 0
    %212 = vmatprep.subr.bf16.mxu0 0
    %213 = vmatpush1.bf16.xpose.msra.mxu0 0
    %214 = vmatprep.subr.bf16.mxu0 0
    %215 = vmatpush1.bf16.xpose.msra.mxu0 0
    %216 = vmatprep.subr.bf16.mxu0 0
    %217 = vmatpush1.bf16.xpose.msra.mxu0 0
    %218 = vmatprep.subr.bf16.mxu0 0
    %219 = vmatpush1.bf16.xpose.msra.mxu0 0
    %220 = vmatprep.mubr.bf16.mxu0 0
    %221 = vmatmul.mubr.bf16.gmra.mrb[0].mxu0 %v186
    %v222 = vpop.f32.mrb[0].mxu0
    %v223 = vadd.f32 0.0, %v222
    %v224 = vpop.f32.mrb[0].mxu0
    %v225 = vpop.f32.mrb[0].mxu0
    %v226 = vpop.f32.mrb[0].mxu0
    %227 = vdwg.mxu0
    %v228 = vpack.i.b16 %v130, %v130
    %v229 = vlaneseq
    %v230 = vshrl.u32 %v229, 7
    %v231 = vsub.s32 0, %v230
    %v232 = vrot.slane %v228, %v231
    %234 = vmatprep.subr.bf16.mxu0 0
    %235 = vmatpush1.bf16.xpose.msra.mxu0 %v97
    %236 = vmatprep.subr.bf16.mxu0 0
    %237 = vmatpush1.bf16.xpose.msra.mxu0 0
    %238 = vmatprep.subr.bf16.mxu0 0
    %239 = vmatpush1.bf16.xpose.msra.mxu0 0
    %240 = vmatprep.subr.bf16.mxu0 0
    %241 = vmatpush1.bf16.xpose.msra.mxu0 0
    %242 = vmatprep.subr.bf16.mxu0 0
    %243 = vmatpush1.bf16.xpose.msra.mxu0 0
    %244 = vmatprep.subr.bf16.mxu0 0
    %245 = vmatpush1.bf16.xpose.msra.mxu0 0
    %246 = vmatprep.subr.bf16.mxu0 0
    %247 = vmatpush1.bf16.xpose.msra.mxu0 0
    %248 = vmatprep.subr.bf16.mxu0 0
    %249 = vmatpush1.bf16.xpose.msra.mxu0 0
    %250 = vmatprep.subr.bf16.mxu0 0
    %251 = vmatpush1.bf16.xpose.msra.mxu0 0
    %252 = vmatprep.subr.bf16.mxu0 0
    %253 = vmatpush1.bf16.xpose.msra.mxu0 0
    %254 = vmatprep.subr.bf16.mxu0 0
    %255 = vmatpush1.bf16.xpose.msra.mxu0 0
    %256 = vmatprep.subr.bf16.mxu0 0
    %257 = vmatpush1.bf16.xpose.msra.mxu0 0
    %258 = vmatprep.subr.bf16.mxu0 0
    %259 = vmatpush1.bf16.xpose.msra.mxu0 0
    %260 = vmatprep.subr.bf16.mxu0 0
    %261 = vmatpush1.bf16.xpose.msra.mxu0 0
    %262 = vmatprep.subr.bf16.mxu0 0
    %263 = vmatpush1.bf16.xpose.msra.mxu0 0
    %264 = vmatprep.subr.bf16.mxu0 0
    %265 = vmatpush1.bf16.xpose.msra.mxu0 0
    %266 = vmatprep.mubr.bf16.mxu0 0
    %267 = vmatmul.mubr.bf16.gmra.mrb[0].mxu0 %v232
    %v268 = vpop.f32.mrb[0].mxu0
    %v269 = vadd.f32 0.0, %v268
    %v270 = vpop.f32.mrb[0].mxu0
    %v271 = vpop.f32.mrb[0].mxu0
    %v272 = vpop.f32.mrb[0].mxu0
    %273 = vdwg.mxu0
    %v274 = vpack.i.b16 %v131, %v131
    %v275 = vlaneseq
    %v276 = vshrl.u32 %v275, 7
    %v277 = vsub.s32 0, %v276
    %v278 = vrot.slane %v274, %v277
    %280 = vmatprep.subr.bf16.mxu0 0
    %281 = vmatpush1.bf16.xpose.msra.mxu0 %v98
    %282 = vmatprep.subr.bf16.mxu0 0
    %283 = vmatpush1.bf16.xpose.msra.mxu0 0
    %284 = vmatprep.subr.bf16.mxu0 0
    %285 = vmatpush1.bf16.xpose.msra.mxu0 0
    %286 = vmatprep.subr.bf16.mxu0 0
    %287 = vmatpush1.bf16.xpose.msra.mxu0 0
    %288 = vmatprep.subr.bf16.mxu0 0
    %289 = vmatpush1.bf16.xpose.msra.mxu0 0
    %290 = vmatprep.subr.bf16.mxu0 0
    %291 = vmatpush1.bf16.xpose.msra.mxu0 0
    %292 = vmatprep.subr.bf16.mxu0 0
    %293 = vmatpush1.bf16.xpose.msra.mxu0 0
    %294 = vmatprep.subr.bf16.mxu0 0
    %295 = vmatpush1.bf16.xpose.msra.mxu0 0
    %296 = vmatprep.subr.bf16.mxu0 0
    %297 = vmatpush1.bf16.xpose.msra.mxu0 0
    %298 = vmatprep.subr.bf16.mxu0 0
    %299 = vmatpush1.bf16.xpose.msra.mxu0 0
    %300 = vmatprep.subr.bf16.mxu0 0
    %301 = vmatpush1.bf16.xpose.msra.mxu0 0
    %302 = vmatprep.subr.bf16.mxu0 0
    %303 = vmatpush1.bf16.xpose.msra.mxu0 0
    %304 = vmatprep.subr.bf16.mxu0 0
    %305 = vmatpush1.bf16.xpose.msra.mxu0 0
    %306 = vmatprep.subr.bf16.mxu0 0
    %307 = vmatpush1.bf16.xpose.msra.mxu0 0
    %308 = vmatprep.subr.bf16.mxu0 0
    %309 = vmatpush1.bf16.xpose.msra.mxu0 0
    %310 = vmatprep.subr.bf16.mxu0 0
    %311 = vmatpush1.bf16.xpose.msra.mxu0 0
    %312 = vmatprep.mubr.bf16.mxu0 0
    %313 = vmatmul.mubr.bf16.gmra.mrb[0].mxu0 %v278
    %v314 = vpop.f32.mrb[0].mxu0
    %v315 = vadd.f32 0.0, %v314
    %v316 = vpop.f32.mrb[0].mxu0
    %v317 = vpop.f32.mrb[0].mxu0
    %v318 = vpop.f32.mrb[0].mxu0
    %319 = vdwg.mxu0
    %v320 = vpack.i.b16 %v132, %v132
    %v321 = vlaneseq
    %v322 = vshrl.u32 %v321, 7
    %v323 = vsub.s32 0, %v322
    %v324 = vrot.slane %v320, %v323
    %326 = vmatprep.subr.bf16.mxu0 0
    %327 = vmatpush1.bf16.xpose.msra.mxu0 %v99
    %328 = vmatprep.subr.bf16.mxu0 0
    %329 = vmatpush1.bf16.xpose.msra.mxu0 0
    %330 = vmatprep.subr.bf16.mxu0 0
    %331 = vmatpush1.bf16.xpose.msra.mxu0 0
    %332 = vmatprep.subr.bf16.mxu0 0
    %333 = vmatpush1.bf16.xpose.msra.mxu0 0
    %334 = vmatprep.subr.bf16.mxu0 0
    %335 = vmatpush1.bf16.xpose.msra.mxu0 0
    %336 = vmatprep.subr.bf16.mxu0 0
    %337 = vmatpush1.bf16.xpose.msra.mxu0 0
    %338 = vmatprep.subr.bf16.mxu0 0
    %339 = vmatpush1.bf16.xpose.msra.mxu0 0
    %340 = vmatprep.subr.bf16.mxu0 0
    %341 = vmatpush1.bf16.xpose.msra.mxu0 0
    %342 = vmatprep.subr.bf16.mxu0 0
    %343 = vmatpush1.bf16.xpose.msra.mxu0 0
    %344 = vmatprep.subr.bf16.mxu0 0
    %345 = vmatpush1.bf16.xpose.msra.mxu0 0
    %346 = vmatprep.subr.bf16.mxu0 0
    %347 = vmatpush1.bf16.xpose.msra.mxu0 0
    %348 = vmatprep.subr.bf16.mxu0 0
    %349 = vmatpush1.bf16.xpose.msra.mxu0 0
    %350 = vmatprep.subr.bf16.mxu0 0
    %351 = vmatpush1.bf16.xpose.msra.mxu0 0
    %352 = vmatprep.subr.bf16.mxu0 0
    %353 = vmatpush1.bf16.xpose.msra.mxu0 0
    %354 = vmatprep.subr.bf16.mxu0 0
    %355 = vmatpush1.bf16.xpose.msra.mxu0 0
    %356 = vmatprep.subr.bf16.mxu0 0
    %357 = vmatpush1.bf16.xpose.msra.mxu0 0
    %358 = vmatprep.mubr.bf16.mxu0 0
    %359 = vmatmul.mubr.bf16.gmra.mrb[0].mxu0 %v324
    %v360 = vpop.f32.mrb[0].mxu0
    %v361 = vadd.f32 0.0, %v360
    %v362 = vpop.f32.mrb[0].mxu0
    %v363 = vpop.f32.mrb[0].mxu0
    %v364 = vpop.f32.mrb[0].mxu0
    %365 = vdwg.mxu0
    %v366 = vpack.i.b16 %v133, %v133
    %v367 = vlaneseq
    %v368 = vshrl.u32 %v367, 7
    %v369 = vsub.s32 0, %v368
    %v370 = vrot.slane %v366, %v369
    %372 = vmatprep.subr.bf16.mxu0 0
    %373 = vmatpush1.bf16.xpose.msra.mxu0 %v100
    %374 = vmatprep.subr.bf16.mxu0 0
    %375 = vmatpush1.bf16.xpose.msra.mxu0 0
    %376 = vmatprep.subr.bf16.mxu0 0
    %377 = vmatpush1.bf16.xpose.msra.mxu0 0
    %378 = vmatprep.subr.bf16.mxu0 0
    %379 = vmatpush1.bf16.xpose.msra.mxu0 0
    %380 = vmatprep.subr.bf16.mxu0 0
    %381 = vmatpush1.bf16.xpose.msra.mxu0 0
    %382 = vmatprep.subr.bf16.mxu0 0
    %383 = vmatpush1.bf16.xpose.msra.mxu0 0
    %384 = vmatprep.subr.bf16.mxu0 0
    %385 = vmatpush1.bf16.xpose.msra.mxu0 0
    %386 = vmatprep.subr.bf16.mxu0 0
    %387 = vmatpush1.bf16.xpose.msra.mxu0 0
    %388 = vmatprep.subr.bf16.mxu0 0
    %389 = vmatpush1.bf16.xpose.msra.mxu0 0
    %390 = vmatprep.subr.bf16.mxu0 0
    %391 = vmatpush1.bf16.xpose.msra.mxu0 0
    %392 = vmatprep.subr.bf16.mxu0 0
    %393 = vmatpush1.bf16.xpose.msra.mxu0 0
    %394 = vmatprep.subr.bf16.mxu0 0
    %395 = vmatpush1.bf16.xpose.msra.mxu0 0
    %396 = vmatprep.subr.bf16.mxu0 0
    %397 = vmatpush1.bf16.xpose.msra.mxu0 0
    %398 = vmatprep.subr.bf16.mxu0 0
    %399 = vmatpush1.bf16.xpose.msra.mxu0 0
    %400 = vmatprep.subr.bf16.mxu0 0
    %401 = vmatpush1.bf16.xpose.msra.mxu0 0
    %402 = vmatprep.subr.bf16.mxu0 0
    %403 = vmatpush1.bf16.xpose.msra.mxu0 0
    %404 = vmatprep.mubr.bf16.mxu0 0
    %405 = vmatmul.mubr.bf16.gmra.mrb[0].mxu0 %v370
    %v406 = vpop.f32.mrb[0].mxu0
    %v407 = vadd.f32 0.0, %v406
    %v408 = vpop.f32.mrb[0].mxu0
    %v409 = vpop.f32.mrb[0].mxu0
    %v410 = vpop.f32.mrb[0].mxu0
    %411 = vdwg.mxu0
    %v412 = vpack.i.b16 %v134, %v134
    %v413 = vlaneseq
    %v414 = vshrl.u32 %v413, 7
    %v415 = vsub.s32 0, %v414
    %v416 = vrot.slane %v412, %v415
    %418 = vmatprep.subr.bf16.mxu0 0
    %419 = vmatpush1.bf16.xpose.msra.mxu0 %v101
    %420 = vmatprep.subr.bf16.mxu0 0
    %421 = vmatpush1.bf16.xpose.msra.mxu0 0
    %422 = vmatprep.subr.bf16.mxu0 0
    %423 = vmatpush1.bf16.xpose.msra.mxu0 0
    %424 = vmatprep.subr.bf16.mxu0 0
    %425 = vmatpush1.bf16.xpose.msra.mxu0 0
    %426 = vmatprep.subr.bf16.mxu0 0
    %427 = vmatpush1.bf16.xpose.msra.mxu0 0
    %428 = vmatprep.subr.bf16.mxu0 0
    %429 = vmatpush1.bf16.xpose.msra.mxu0 0
    %430 = vmatprep.subr.bf16.mxu0 0
    %431 = vmatpush1.bf16.xpose.msra.mxu0 0
    %432 = vmatprep.subr.bf16.mxu0 0
    %433 = vmatpush1.bf16.xpose.msra.mxu0 0
    %434 = vmatprep.subr.bf16.mxu0 0
    %435 = vmatpush1.bf16.xpose.msra.mxu0 0
    %436 = vmatprep.subr.bf16.mxu0 0
    %437 = vmatpush1.bf16.xpose.msra.mxu0 0
    %438 = vmatprep.subr.bf16.mxu0 0
    %439 = vmatpush1.bf16.xpose.msra.mxu0 0
    %440 = vmatprep.subr.bf16.mxu0 0
    %441 = vmatpush1.bf16.xpose.msra.mxu0 0
    %442 = vmatprep.subr.bf16.mxu0 0
    %443 = vmatpush1.bf16.xpose.msra.mxu0 0
    %444 = vmatprep.subr.bf16.mxu0 0
    %445 = vmatpush1.bf16.xpose.msra.mxu0 0
    %446 = vmatprep.subr.bf16.mxu0 0
    %447 = vmatpush1.bf16.xpose.msra.mxu0 0
    %448 = vmatprep.subr.bf16.mxu0 0
    %449 = vmatpush1.bf16.xpose.msra.mxu0 0
    %450 = vmatprep.mubr.bf16.mxu0 0
    %451 = vmatmul.mubr.bf16.gmra.mrb[0].mxu0 %v416
    %v452 = vpop.f32.mrb[0].mxu0
    %v453 = vadd.f32 0.0, %v452
    %v454 = vpop.f32.mrb[0].mxu0
    %v455 = vpop.f32.mrb[0].mxu0
    %v456 = vpop.f32.mrb[0].mxu0
    %457 = vdwg.mxu0
    %v458 = vpack.i.b16 %v135, %v135
    %v459 = vlaneseq
    %v460 = vshrl.u32 %v459, 7
    %v461 = vsub.s32 0, %v460
    %v462 = vrot.slane %v458, %v461
    %464 = vmatprep.subr.bf16.mxu0 0
    %465 = vmatpush1.bf16.xpose.msra.mxu0 %v102
    %466 = vmatprep.subr.bf16.mxu0 0
    %467 = vmatpush1.bf16.xpose.msra.mxu0 0
    %468 = vmatprep.subr.bf16.mxu0 0
    %469 = vmatpush1.bf16.xpose.msra.mxu0 0
    %470 = vmatprep.subr.bf16.mxu0 0
    %471 = vmatpush1.bf16.xpose.msra.mxu0 0
    %472 = vmatprep.subr.bf16.mxu0 0
    %473 = vmatpush1.bf16.xpose.msra.mxu0 0
    %474 = vmatprep.subr.bf16.mxu0 0
    %475 = vmatpush1.bf16.xpose.msra.mxu0 0
    %476 = vmatprep.subr.bf16.mxu0 0
    %477 = vmatpush1.bf16.xpose.msra.mxu0 0
    %478 = vmatprep.subr.bf16.mxu0 0
    %479 = vmatpush1.bf16.xpose.msra.mxu0 0
    %480 = vmatprep.subr.bf16.mxu0 0
    %481 = vmatpush1.bf16.xpose.msra.mxu0 0
    %482 = vmatprep.subr.bf16.mxu0 0
    %483 = vmatpush1.bf16.xpose.msra.mxu0 0
    %484 = vmatprep.subr.bf16.mxu0 0
    %485 = vmatpush1.bf16.xpose.msra.mxu0 0
    %486 = vmatprep.subr.bf16.mxu0 0
    %487 = vmatpush1.bf16.xpose.msra.mxu0 0
    %488 = vmatprep.subr.bf16.mxu0 0
    %489 = vmatpush1.bf16.xpose.msra.mxu0 0
    %490 = vmatprep.subr.bf16.mxu0 0
    %491 = vmatpush1.bf16.xpose.msra.mxu0 0
    %492 = vmatprep.subr.bf16.mxu0 0
    %493 = vmatpush1.bf16.xpose.msra.mxu0 0
    %494 = vmatprep.subr.bf16.mxu0 0
    %495 = vmatpush1.bf16.xpose.msra.mxu0 0
    %496 = vmatprep.mubr.bf16.mxu0 0
    %497 = vmatmul.mubr.bf16.gmra.mrb[0].mxu0 %v462
    %v498 = vpop.f32.mrb[0].mxu0
    %v499 = vadd.f32 0.0, %v498
    %v500 = vpop.f32.mrb[0].mxu0
    %v501 = vpop.f32.mrb[0].mxu0
    %v502 = vpop.f32.mrb[0].mxu0
    %503 = vdwg.mxu0
    %vm504 = vcmask 57344
    %v505 = vsel %vm504, %v177, -inf
    %506 = vmax.xlane.f32.xlu0 %v505
    %v507 = vpop.xlane.xlu0 %506
    %v508 = vsel %vm504, %v223, -inf
    %509 = vmax.xlane.f32.xlu0 %v508
    %v510 = vpop.xlane.xlu0 %509
    %v511 = vsel %vm504, %v269, -inf
    %512 = vmax.xlane.f32.xlu0 %v511
    %v513 = vpop.xlane.xlu0 %512
    %v514 = vsel %vm504, %v315, -inf
    %515 = vmax.xlane.f32.xlu0 %v514
    %v516 = vpop.xlane.xlu0 %515
    %v517 = vsel %vm504, %v361, -inf
    %518 = vmax.xlane.f32.xlu0 %v517
    %v519 = vpop.xlane.xlu0 %518
    %v520 = vsel %vm504, %v407, -inf
    %521 = vmax.xlane.f32.xlu0 %v520
    %v522 = vpop.xlane.xlu0 %521
    %v523 = vsel %vm504, %v453, -inf
    %524 = vmax.xlane.f32.xlu0 %v523
    %v525 = vpop.xlane.xlu0 %524
    %v526 = vsel %vm504, %v499, -inf
    %527 = vmax.xlane.f32.xlu0 %v526
    %v528 = vpop.xlane.xlu0 %527
    %v529 = vsub.f32 %v177, %v507
    %v530 = vsub.f32 %v223, %v510
    %v531 = vsub.f32 %v269, %v513
    %v532 = vsub.f32 %v315, %v516
    %v533 = vsub.f32 %v361, %v519
    %v534 = vsub.f32 %v407, %v522
    %v535 = vsub.f32 %v453, %v525
    %v536 = vsub.f32 %v499, %v528
    %v537 = vmul.f32 %v529, 1.442695
    %v538 = vpow.pop %v537
    %v539 = vmul.f32 %v530, 1.442695
    %v540 = vpow.pop %v539
    %v541 = vmul.f32 %v531, 1.442695
    %v542 = vpow.pop %v541
    %v543 = vmul.f32 %v532, 1.442695
    %v544 = vpow.pop %v543
    %v545 = vmul.f32 %v533, 1.442695
    %v546 = vpow.pop %v545
    %v547 = vmul.f32 %v534, 1.442695
    %v548 = vpow.pop %v547
    %v549 = vmul.f32 %v535, 1.442695
    %v550 = vpow.pop %v549
    %v551 = vmul.f32 %v536, 1.442695
    %v552 = vpow.pop %v551
    %v553 = vsel %vm504, %v538, 0.0
    %554 = vadd.xlane.f32.xlu0 %v553
    %v555 = vpop.xlane.xlu0 %554
    %v556 = vsel %vm504, %v540, 0.0
    %557 = vadd.xlane.f32.xlu0 %v556
    %v558 = vpop.xlane.xlu0 %557
    %v559 = vsel %vm504, %v542, 0.0
    %560 = vadd.xlane.f32.xlu0 %v559
    %v561 = vpop.xlane.xlu0 %560
    %v562 = vsel %vm504, %v544, 0.0
    %563 = vadd.xlane.f32.xlu0 %v562
    %v564 = vpop.xlane.xlu0 %563
    %v565 = vsel %vm504, %v546, 0.0
    %566 = vadd.xlane.f32.xlu0 %v565
    %v567 = vpop.xlane.xlu0 %566
    %v568 = vsel %vm504, %v548, 0.0
    %569 = vadd.xlane.f32.xlu0 %v568
    %v570 = vpop.xlane.xlu0 %569
    %v571 = vsel %vm504, %v550, 0.0
    %572 = vadd.xlane.f32.xlu0 %v571
    %v573 = vpop.xlane.xlu0 %572
    %v574 = vsel %vm504, %v552, 0.0
    %575 = vadd.xlane.f32.xlu0 %v574
    %v576 = vpop.xlane.xlu0 %575
    %v577 = vrcp.pop %v555
    %v578 = vrcp.pop %v558
    %v579 = vrcp.pop %v561
    %v580 = vrcp.pop %v564
    %v581 = vrcp.pop %v567
    %v582 = vrcp.pop %v570
    %v583 = vrcp.pop %v573
    %v584 = vrcp.pop %v576
    %v585 = vmul.f32 %v538, %v577
    %v586 = vmul.f32 %v540, %v578
    %v587 = vmul.f32 %v542, %v579
    %v588 = vmul.f32 %v544, %v580
    %v589 = vmul.f32 %v546, %v581
    %v590 = vmul.f32 %v548, %v582
    %v591 = vmul.f32 %v550, %v583
    %v592 = vmul.f32 %v552, %v584
    %v593 = vpack.c.bf16 %v585, %v585
    %v594 = vpack.c.bf16 %v586, %v586
    %v595 = vpack.c.bf16 %v587, %v587
    %v596 = vpack.c.bf16 %v588, %v588
    %v597 = vpack.c.bf16 %v589, %v589
    %v598 = vpack.c.bf16 %v590, %v590
    %v599 = vpack.c.bf16 %v591, %v591
    %v600 = vpack.c.bf16 %v592, %v592
    %vm601 = vcmask 64512
    %v603 = vsel %vm601, %v593, 0
    %vm605 = vcmask 1043456
    %v607 = vsel %vm605, %v95, 0
    %609 = vmatprep.subr.bf16.mxu0 0
    %610 = vmatpush1.bf16.msra.mxu0 %v607
    %611 = vmatprep.subr.bf16.mxu0 0
    %612 = vmatpush1.bf16.msra.mxu0 0
    %613 = vmatprep.subr.bf16.mxu0 0
    %614 = vmatpush1.bf16.msra.mxu0 0
    %615 = vmatprep.subr.bf16.mxu0 0
    %616 = vmatpush1.bf16.msra.mxu0 0
    %617 = vmatprep.subr.bf16.mxu0 0
    %618 = vmatpush1.bf16.msra.mxu0 0
    %619 = vmatprep.subr.bf16.mxu0 0
    %620 = vmatpush1.bf16.msra.mxu0 0
    %621 = vmatprep.subr.bf16.mxu0 0
    %622 = vmatpush1.bf16.msra.mxu0 0
    %623 = vmatprep.subr.bf16.mxu0 0
    %624 = vmatpush1.bf16.msra.mxu0 0
    %625 = vmatprep.subr.bf16.mxu0 0
    %626 = vmatpush1.bf16.msra.mxu0 0
    %627 = vmatprep.subr.bf16.mxu0 0
    %628 = vmatpush1.bf16.msra.mxu0 0
    %629 = vmatprep.subr.bf16.mxu0 0
    %630 = vmatpush1.bf16.msra.mxu0 0
    %631 = vmatprep.subr.bf16.mxu0 0
    %632 = vmatpush1.bf16.msra.mxu0 0
    %633 = vmatprep.subr.bf16.mxu0 0
    %634 = vmatpush1.bf16.msra.mxu0 0
    %635 = vmatprep.subr.bf16.mxu0 0
    %636 = vmatpush1.bf16.msra.mxu0 0
    %637 = vmatprep.subr.bf16.mxu0 0
    %638 = vmatpush1.bf16.msra.mxu0 0
    %639 = vmatprep.subr.bf16.mxu0 0
    %640 = vmatpush1.bf16.msra.mxu0 0
    %641 = vmatprep.mubr.bf16.mxu0 0
    %642 = vmatmul.mubr.bf16.gmra.mrb[0].mxu0 %v603
    %v643 = vpop.f32.mrb[0].mxu0
    %v644 = vadd.f32 0.0, %v643
    %v645 = vpop.f32.mrb[0].mxu0
    %v646 = vpop.f32.mrb[0].mxu0
    %v647 = vpop.f32.mrb[0].mxu0
    %648 = vdwg.mxu0
    %v650 = vsel %vm601, %v594, 0
    %v653 = vsel %vm605, %v96, 0
    %655 = vmatprep.subr.bf16.mxu0 0
    %656 = vmatpush1.bf16.msra.mxu0 %v653
    %657 = vmatprep.subr.bf16.mxu0 0
    %658 = vmatpush1.bf16.msra.mxu0 0
    %659 = vmatprep.subr.bf16.mxu0 0
    %660 = vmatpush1.bf16.msra.mxu0 0
    %661 = vmatprep.subr.bf16.mxu0 0
    %662 = vmatpush1.bf16.msra.mxu0 0
    %663 = vmatprep.subr.bf16.mxu0 0
    %664 = vmatpush1.bf16.msra.mxu0 0
    %665 = vmatprep.subr.bf16.mxu0 0
    %666 = vmatpush1.bf16.msra.mxu0 0
    %667 = vmatprep.subr.bf16.mxu0 0
    %668 = vmatpush1.bf16.msra.mxu0 0
    %669 = vmatprep.subr.bf16.mxu0 0
    %670 = vmatpush1.bf16.msra.mxu0 0
    %671 = vmatprep.subr.bf16.mxu0 0
    %672 = vmatpush1.bf16.msra.mxu0 0
    %673 = vmatprep.subr.bf16.mxu0 0
    %674 = vmatpush1.bf16.msra.mxu0 0
    %675 = vmatprep.subr.bf16.mxu0 0
    %676 = vmatpush1.bf16.msra.mxu0 0
    %677 = vmatprep.subr.bf16.mxu0 0
    %678 = vmatpush1.bf16.msra.mxu0 0
    %679 = vmatprep.subr.bf16.mxu0 0
    %680 = vmatpush1.bf16.msra.mxu0 0
    %681 = vmatprep.subr.bf16.mxu0 0
    %682 = vmatpush1.bf16.msra.mxu0 0
    %683 = vmatprep.subr.bf16.mxu0 0
    %684 = vmatpush1.bf16.msra.mxu0 0
    %685 = vmatprep.subr.bf16.mxu0 0
    %686 = vmatpush1.bf16.msra.mxu0 0
    %687 = vmatprep.mubr.bf16.mxu0 0
    %688 = vmatmul.mubr.bf16.gmra.mrb[0].mxu0 %v650
    %v689 = vpop.f32.mrb[0].mxu0
    %v690 = vadd.f32 0.0, %v689
    %v691 = vpop.f32.mrb[0].mxu0
    %v692 = vpop.f32.mrb[0].mxu0
    %v693 = vpop.f32.mrb[0].mxu0
    %694 = vdwg.mxu0
    %v696 = vsel %vm601, %v595, 0
    %v699 = vsel %vm605, %v97, 0
    %701 = vmatprep.subr.bf16.mxu0 0
    %702 = vmatpush1.bf16.msra.mxu0 %v699
    %703 = vmatprep.subr.bf16.mxu0 0
    %704 = vmatpush1.bf16.msra.mxu0 0
    %705 = vmatprep.subr.bf16.mxu0 0
    %706 = vmatpush1.bf16.msra.mxu0 0
    %707 = vmatprep.subr.bf16.mxu0 0
    %708 = vmatpush1.bf16.msra.mxu0 0
    %709 = vmatprep.subr.bf16.mxu0 0
    %710 = vmatpush1.bf16.msra.mxu0 0
    %711 = vmatprep.subr.bf16.mxu0 0
    %712 = vmatpush1.bf16.msra.mxu0 0
    %713 = vmatprep.subr.bf16.mxu0 0
    %714 = vmatpush1.bf16.msra.mxu0 0
    %715 = vmatprep.subr.bf16.mxu0 0
    %716 = vmatpush1.bf16.msra.mxu0 0
    %717 = vmatprep.subr.bf16.mxu0 0
    %718 = vmatpush1.bf16.msra.mxu0 0
    %719 = vmatprep.subr.bf16.mxu0 0
    %720 = vmatpush1.bf16.msra.mxu0 0
    %721 = vmatprep.subr.bf16.mxu0 0
    %722 = vmatpush1.bf16.msra.mxu0 0
    %723 = vmatprep.subr.bf16.mxu0 0
    %724 = vmatpush1.bf16.msra.mxu0 0
    %725 = vmatprep.subr.bf16.mxu0 0
    %726 = vmatpush1.bf16.msra.mxu0 0
    %727 = vmatprep.subr.bf16.mxu0 0
    %728 = vmatpush1.bf16.msra.mxu0 0
    %729 = vmatprep.subr.bf16.mxu0 0
    %730 = vmatpush1.bf16.msra.mxu0 0
    %731 = vmatprep.subr.bf16.mxu0 0
    %732 = vmatpush1.bf16.msra.mxu0 0
    %733 = vmatprep.mubr.bf16.mxu0 0
    %734 = vmatmul.mubr.bf16.gmra.mrb[0].mxu0 %v696
    %v735 = vpop.f32.mrb[0].mxu0
    %v736 = vadd.f32 0.0, %v735
    %v737 = vpop.f32.mrb[0].mxu0
    %v738 = vpop.f32.mrb[0].mxu0
    %v739 = vpop.f32.mrb[0].mxu0
    %740 = vdwg.mxu0
    %v742 = vsel %vm601, %v596, 0
    %v745 = vsel %vm605, %v98, 0
    %747 = vmatprep.subr.bf16.mxu0 0
    %748 = vmatpush1.bf16.msra.mxu0 %v745
    %749 = vmatprep.subr.bf16.mxu0 0
    %750 = vmatpush1.bf16.msra.mxu0 0
    %751 = vmatprep.subr.bf16.mxu0 0
    %752 = vmatpush1.bf16.msra.mxu0 0
    %753 = vmatprep.subr.bf16.mxu0 0
    %754 = vmatpush1.bf16.msra.mxu0 0
    %755 = vmatprep.subr.bf16.mxu0 0
    %756 = vmatpush1.bf16.msra.mxu0 0
    %757 = vmatprep.subr.bf16.mxu0 0
    %758 = vmatpush1.bf16.msra.mxu0 0
    %759 = vmatprep.subr.bf16.mxu0 0
    %760 = vmatpush1.bf16.msra.mxu0 0
    %761 = vmatprep.subr.bf16.mxu0 0
    %762 = vmatpush1.bf16.msra.mxu0 0
    %763 = vmatprep.subr.bf16.mxu0 0
    %764 = vmatpush1.bf16.msra.mxu0 0
    %765 = vmatprep.subr.bf16.mxu0 0
    %766 = vmatpush1.bf16.msra.mxu0 0
    %767 = vmatprep.subr.bf16.mxu0 0
    %768 = vmatpush1.bf16.msra.mxu0 0
    %769 = vmatprep.subr.bf16.mxu0 0
    %770 = vmatpush1.bf16.msra.mxu0 0
    %771 = vmatprep.subr.bf16.mxu0 0
    %772 = vmatpush1.bf16.msra.mxu0 0
    %773 = vmatprep.subr.bf16.mxu0 0
    %774 = vmatpush1.bf16.msra.mxu0 0
    %775 = vmatprep.subr.bf16.mxu0 0
    %776 = vmatpush1.bf16.msra.mxu0 0
    %777 = vmatprep.subr.bf16.mxu0 0
    %778 = vmatpush1.bf16.msra.mxu0 0
    %779 = vmatprep.mubr.bf16.mxu0 0
    %780 = vmatmul.mubr.bf16.gmra.mrb[0].mxu0 %v742
    %v781 = vpop.f32.mrb[0].mxu0
    %v782 = vadd.f32 0.0, %v781
    %v783 = vpop.f32.mrb[0].mxu0
    %v784 = vpop.f32.mrb[0].mxu0
    %v785 = vpop.f32.mrb[0].mxu0
    %786 = vdwg.mxu0
    %v788 = vsel %vm601, %v597, 0
    %v791 = vsel %vm605, %v99, 0
    %793 = vmatprep.subr.bf16.mxu0 0
    %794 = vmatpush1.bf16.msra.mxu0 %v791
    %795 = vmatprep.subr.bf16.mxu0 0
    %796 = vmatpush1.bf16.msra.mxu0 0
    %797 = vmatprep.subr.bf16.mxu0 0
    %798 = vmatpush1.bf16.msra.mxu0 0
    %799 = vmatprep.subr.bf16.mxu0 0
    %800 = vmatpush1.bf16.msra.mxu0 0
    %801 = vmatprep.subr.bf16.mxu0 0
    %802 = vmatpush1.bf16.msra.mxu0 0
    %803 = vmatprep.subr.bf16.mxu0 0
    %804 = vmatpush1.bf16.msra.mxu0 0
    %805 = vmatprep.subr.bf16.mxu0 0
    %806 = vmatpush1.bf16.msra.mxu0 0
    %807 = vmatprep.subr.bf16.mxu0 0
    %808 = vmatpush1.bf16.msra.mxu0 0
    %809 = vmatprep.subr.bf16.mxu0 0
    %810 = vmatpush1.bf16.msra.mxu0 0
    %811 = vmatprep.subr.bf16.mxu0 0
    %812 = vmatpush1.bf16.msra.mxu0 0
    %813 = vmatprep.subr.bf16.mxu0 0
    %814 = vmatpush1.bf16.msra.mxu0 0
    %815 = vmatprep.subr.bf16.mxu0 0
    %816 = vmatpush1.bf16.msra.mxu0 0
    %817 = vmatprep.subr.bf16.mxu0 0
    %818 = vmatpush1.bf16.msra.mxu0 0
    %819 = vmatprep.subr.bf16.mxu0 0
    %820 = vmatpush1.bf16.msra.mxu0 0
    %821 = vmatprep.subr.bf16.mxu0 0
    %822 = vmatpush1.bf16.msra.mxu0 0
    %823 = vmatprep.subr.bf16.mxu0 0
    %824 = vmatpush1.bf16.msra.mxu0 0
    %825 = vmatprep.mubr.bf16.mxu0 0
    %826 = vmatmul.mubr.bf16.gmra.mrb[0].mxu0 %v788
    %v827 = vpop.f32.mrb[0].mxu0
    %v828 = vadd.f32 0.0, %v827
    %v829 = vpop.f32.mrb[0].mxu0
    %v830 = vpop.f32.mrb[0].mxu0
    %v831 = vpop.f32.mrb[0].mxu0
    %832 = vdwg.mxu0
    %v834 = vsel %vm601, %v598, 0
    %v837 = vsel %vm605, %v100, 0
    %839 = vmatprep.subr.bf16.mxu0 0
    %840 = vmatpush1.bf16.msra.mxu0 %v837
    %841 = vmatprep.subr.bf16.mxu0 0
    %842 = vmatpush1.bf16.msra.mxu0 0
    %843 = vmatprep.subr.bf16.mxu0 0
    %844 = vmatpush1.bf16.msra.mxu0 0
    %845 = vmatprep.subr.bf16.mxu0 0
    %846 = vmatpush1.bf16.msra.mxu0 0
    %847 = vmatprep.subr.bf16.mxu0 0
    %848 = vmatpush1.bf16.msra.mxu0 0
    %849 = vmatprep.subr.bf16.mxu0 0
    %850 = vmatpush1.bf16.msra.mxu0 0
    %851 = vmatprep.subr.bf16.mxu0 0
    %852 = vmatpush1.bf16.msra.mxu0 0
    %853 = vmatprep.subr.bf16.mxu0 0
    %854 = vmatpush1.bf16.msra.mxu0 0
    %855 = vmatprep.subr.bf16.mxu0 0
    %856 = vmatpush1.bf16.msra.mxu0 0
    %857 = vmatprep.subr.bf16.mxu0 0
    %858 = vmatpush1.bf16.msra.mxu0 0
    %859 = vmatprep.subr.bf16.mxu0 0
    %860 = vmatpush1.bf16.msra.mxu0 0
    %861 = vmatprep.subr.bf16.mxu0 0
    %862 = vmatpush1.bf16.msra.mxu0 0
    %863 = vmatprep.subr.bf16.mxu0 0
    %864 = vmatpush1.bf16.msra.mxu0 0
    %865 = vmatprep.subr.bf16.mxu0 0
    %866 = vmatpush1.bf16.msra.mxu0 0
    %867 = vmatprep.subr.bf16.mxu0 0
    %868 = vmatpush1.bf16.msra.mxu0 0
    %869 = vmatprep.subr.bf16.mxu0 0
    %870 = vmatpush1.bf16.msra.mxu0 0
    %871 = vmatprep.mubr.bf16.mxu0 0
    %872 = vmatmul.mubr.bf16.gmra.mrb[0].mxu0 %v834
    %v873 = vpop.f32.mrb[0].mxu0
    %v874 = vadd.f32 0.0, %v873
    %v875 = vpop.f32.mrb[0].mxu0
    %v876 = vpop.f32.mrb[0].mxu0
    %v877 = vpop.f32.mrb[0].mxu0
    %878 = vdwg.mxu0
    %v880 = vsel %vm601, %v599, 0
    %v883 = vsel %vm605, %v101, 0
    %885 = vmatprep.subr.bf16.mxu0 0
    %886 = vmatpush1.bf16.msra.mxu0 %v883
    %887 = vmatprep.subr.bf16.mxu0 0
    %888 = vmatpush1.bf16.msra.mxu0 0
    %889 = vmatprep.subr.bf16.mxu0 0
    %890 = vmatpush1.bf16.msra.mxu0 0
    %891 = vmatprep.subr.bf16.mxu0 0
    %892 = vmatpush1.bf16.msra.mxu0 0
    %893 = vmatprep.subr.bf16.mxu0 0
    %894 = vmatpush1.bf16.msra.mxu0 0
    %895 = vmatprep.subr.bf16.mxu0 0
    %896 = vmatpush1.bf16.msra.mxu0 0
    %897 = vmatprep.subr.bf16.mxu0 0
    %898 = vmatpush1.bf16.msra.mxu0 0
    %899 = vmatprep.subr.bf16.mxu0 0
    %900 = vmatpush1.bf16.msra.mxu0 0
    %901 = vmatprep.subr.bf16.mxu0 0
    %902 = vmatpush1.bf16.msra.mxu0 0
    %903 = vmatprep.subr.bf16.mxu0 0
    %904 = vmatpush1.bf16.msra.mxu0 0
    %905 = vmatprep.subr.bf16.mxu0 0
    %906 = vmatpush1.bf16.msra.mxu0 0
    %907 = vmatprep.subr.bf16.mxu0 0
    %908 = vmatpush1.bf16.msra.mxu0 0
    %909 = vmatprep.subr.bf16.mxu0 0
    %910 = vmatpush1.bf16.msra.mxu0 0
    %911 = vmatprep.subr.bf16.mxu0 0
    %912 = vmatpush1.bf16.msra.mxu0 0
    %913 = vmatprep.subr.bf16.mxu0 0
    %914 = vmatpush1.bf16.msra.mxu0 0
    %915 = vmatprep.subr.bf16.mxu0 0
    %916 = vmatpush1.bf16.msra.mxu0 0
    %917 = vmatprep.mubr.bf16.mxu0 0
    %918 = vmatmul.mubr.bf16.gmra.mrb[0].mxu0 %v880
    %v919 = vpop.f32.mrb[0].mxu0
    %v920 = vadd.f32 0.0, %v919
    %v921 = vpop.f32.mrb[0].mxu0
    %v922 = vpop.f32.mrb[0].mxu0
    %v923 = vpop.f32.mrb[0].mxu0
    %924 = vdwg.mxu0
    %v926 = vsel %vm601, %v600, 0
    %v929 = vsel %vm605, %v102, 0
    %931 = vmatprep.subr.bf16.mxu0 0
    %932 = vmatpush1.bf16.msra.mxu0 %v929
    %933 = vmatprep.subr.bf16.mxu0 0
    %934 = vmatpush1.bf16.msra.mxu0 0
    %935 = vmatprep.subr.bf16.mxu0 0
    %936 = vmatpush1.bf16.msra.mxu0 0
    %937 = vmatprep.subr.bf16.mxu0 0
    %938 = vmatpush1.bf16.msra.mxu0 0
    %939 = vmatprep.subr.bf16.mxu0 0
    %940 = vmatpush1.bf16.msra.mxu0 0
    %941 = vmatprep.subr.bf16.mxu0 0
    %942 = vmatpush1.bf16.msra.mxu0 0
    %943 = vmatprep.subr.bf16.mxu0 0
    %944 = vmatpush1.bf16.msra.mxu0 0
    %945 = vmatprep.subr.bf16.mxu0 0
    %946 = vmatpush1.bf16.msra.mxu0 0
    %947 = vmatprep.subr.bf16.mxu0 0
    %948 = vmatpush1.bf16.msra.mxu0 0
    %949 = vmatprep.subr.bf16.mxu0 0
    %950 = vmatpush1.bf16.msra.mxu0 0
    %951 = vmatprep.subr.bf16.mxu0 0
    %952 = vmatpush1.bf16.msra.mxu0 0
    %953 = vmatprep.subr.bf16.mxu0 0
    %954 = vmatpush1.bf16.msra.mxu0 0
    %955 = vmatprep.subr.bf16.mxu0 0
    %956 = vmatpush1.bf16.msra.mxu0 0
    %957 = vmatprep.subr.bf16.mxu0 0
    %958 = vmatpush1.bf16.msra.mxu0 0
    %959 = vmatprep.subr.bf16.mxu0 0
    %960 = vmatpush1.bf16.msra.mxu0 0
    %961 = vmatprep.subr.bf16.mxu0 0
    %962 = vmatpush1.bf16.msra.mxu0 0
    %963 = vmatprep.mubr.bf16.mxu0 0
    %964 = vmatmul.mubr.bf16.gmra.mrb[0].mxu0 %v926
    %v965 = vpop.f32.mrb[0].mxu0
    %v966 = vadd.f32 0.0, %v965
    %v967 = vpop.f32.mrb[0].mxu0
    %v968 = vpop.f32.mrb[0].mxu0
    %v969 = vpop.f32.mrb[0].mxu0
    %970 = vdwg.mxu0
    %v971 = vld [vmem:[%s0] sm:$0xff]
    %v972 = vld [vmem:[%s3] sm:$0x7]
    %974 = vset.pattern.permute.xlu0 0
    %975 = vperm.xlu0 %974, %v971
    %v976 = vpop.permute.xlu0 %975
    %v979 = vlaneseq
    %v980 = vshrl.u32 %v979, 7
    %v981 = vsub.s32 0, %v980
    %v982 = vrot.slane %v972, %v981
    %v983 = vlaneseq
    %v984 = vshrl.u32 %v983, 7
    %v985 = vsub.s32 1, %v984
    %v986 = vrot.slane %v972, %v985
    %v987 = vlaneseq
    %v988 = vshrl.u32 %v987, 7
    %v989 = vsub.s32 2, %v988
    %v990 = vrot.slane %v972, %v989
    %v994 = vmul.f32 %v976, %v982
    %v995 = vmul.f32 %v976, %v986
    %v996 = vmul.f32 %v976, %v990
    %v997 = vpack.c.bf16 %v644, %v644
    %v998 = vpack.c.bf16 %v690, %v690
    %v999 = vpack.c.bf16 %v736, %v736
    %v1000 = vpack.c.bf16 %v782, %v782
    %v1001 = vpack.c.bf16 %v828, %v828
    %v1002 = vpack.c.bf16 %v874, %v874
    %v1003 = vpack.c.bf16 %v920, %v920
    %v1004 = vpack.c.bf16 %v966, %v966
    %v1005 = vld [vmem:[#allocation5] sm:$0xff]
    %v1006 = vld [vmem:[#allocation5 + $0x8] sm:$0xf]
    %v1007 = vld [vmem:[#allocation5 + $0xc] sm:$0xff]
    %v1008 = vld [vmem:[#allocation5 + $0x14] sm:$0xf]
    %v1009 = vld [vmem:[#allocation5 + $0x18] sm:$0xff]
    %v1010 = vld [vmem:[#allocation5 + $0x20] sm:$0xf]
    %v1011 = vld [vmem:[#allocation5 + $0x24] sm:$0xff]
    %v1012 = vld [vmem:[#allocation5 + $0x2c] sm:$0xf]
    %v1013 = vld [vmem:[#allocation5 + $0x30] sm:$0xff]
    %v1014 = vld [vmem:[#allocation5 + $0x38] sm:$0xf]
    %v1015 = vld [vmem:[#allocation5 + $0x3c] sm:$0xff]
    %v1016 = vld [vmem:[#allocation5 + $0x44] sm:$0xf]
    %v1017 = vld [vmem:[#allocation5 + $0x48] sm:$0xff]
    %v1018 = vld [vmem:[#allocation5 + $0x50] sm:$0xf]
    %v1019 = vld [vmem:[#allocation5 + $0x54] sm:$0xff]
    %v1020 = vld [vmem:[#allocation5 + $0x5c] sm:$0xf]
    %v1021 = vld [vmem:[#allocation5 + $0x60] sm:$0xff]
    %v1022 = vld [vmem:[#allocation5 + $0x68] sm:$0xf]
    %v1023 = vld [vmem:[#allocation5 + $0x6c] sm:$0xff]
    %v1024 = vld [vmem:[#allocation5 + $0x74] sm:$0xf]
    %v1025 = vld [vmem:[#allocation5 + $0x78] sm:$0xff]
    %v1026 = vld [vmem:[#allocation5 + $0x80] sm:$0xf]
    %v1027 = vld [vmem:[#allocation5 + $0x84] sm:$0xff]
    %v1028 = vld [vmem:[#allocation5 + $0x8c] sm:$0xf]
    %v1029 = vld [vmem:[#allocation5 + $0x90] sm:$0xff]
    %v1030 = vld [vmem:[#allocation5 + $0x98] sm:$0xf]
    %v1031 = vld [vmem:[#allocation5 + $0x9c] sm:$0xff]
    %v1032 = vld [vmem:[#allocation5 + $0xa4] sm:$0xf]
    %v1033 = vld [vmem:[#allocation5 + $0xa8] sm:$0xff]
    %v1034 = vld [vmem:[#allocation5 + $0xb0] sm:$0xf]
    %v1035 = vld [vmem:[#allocation5 + $0xb4] sm:$0xff]
    %v1036 = vld [vmem:[#allocation5 + $0xbc] sm:$0xf]
    %v1045 = vunpack.c.l.b16 %v997
    %v1046 = vunpack.c.l.b16 %v998
    %v1047 = vunpack.c.l.b16 %v999
    %v1048 = vunpack.c.l.b16 %v1000
    %v1049 = vunpack.c.l.b16 %v1001
    %v1050 = vunpack.c.l.b16 %v1002
    %v1051 = vunpack.c.l.b16 %v1003
    %v1052 = vunpack.c.l.b16 %v1004
    %v1053 = vrot.slane %v1046, 7
    %vm1054 = vcmask 1041409
    %v1055 = vsel %vm1054, %v1053, %v1045
    %v1056 = vrot.slane %v1047, 6
    %vm1057 = vcmask 1042434
    %v1058 = vsel %vm1057, %v1056, %v1055
    %v1059 = vrot.slane %v1048, 5
    %vm1060 = vcmask 1043459
    %v1061 = vsel %vm1060, %v1059, %v1058
    %v1062 = vrot.slane %v1049, 4
    %vm1063 = vcmask 1044484
    %v1064 = vsel %vm1063, %v1062, %v1061
    %v1065 = vrot.slane %v1050, 3
    %vm1066 = vcmask 1045509
    %v1067 = vsel %vm1066, %v1065, %v1064
    %v1068 = vrot.slane %v1051, 2
    %vm1069 = vcmask 1046534
    %v1070 = vsel %vm1069, %v1068, %v1067
    %v1071 = vrot.slane %v1052, 1
    %vm1072 = vcmask 1047559
    %v1073 = vsel %vm1072, %v1071, %v1070
    %v1074 = vpack.c.b16 %v1073, %v1073
    %v1108 = vunpack.c.l.b16 %v1005
    %v1109 = vunpack.c.h.b16 %v1005
    %v1110 = vunpack.c.l.b16 %v1006
    %v1111 = vunpack.c.l.b16 %v1007
    %v1112 = vunpack.c.h.b16 %v1007
    %v1113 = vunpack.c.l.b16 %v1008
    %v1114 = vunpack.c.l.b16 %v1009
    %v1115 = vunpack.c.h.b16 %v1009
    %v1116 = vunpack.c.l.b16 %v1010
    %v1117 = vunpack.c.l.b16 %v1011
    %v1118 = vunpack.c.h.b16 %v1011
    %v1119 = vunpack.c.l.b16 %v1012
    %v1120 = vunpack.c.l.b16 %v1013
    %v1121 = vunpack.c.h.b16 %v1013
    %v1122 = vunpack.c.l.b16 %v1014
    %v1123 = vunpack.c.l.b16 %v1015
    %v1124 = vunpack.c.h.b16 %v1015
    %v1125 = vunpack.c.l.b16 %v1016
    %v1126 = vunpack.c.l.b16 %v1017
    %v1127 = vunpack.c.h.b16 %v1017
    %v1128 = vunpack.c.l.b16 %v1018
    %v1129 = vunpack.c.l.b16 %v1019
    %v1130 = vunpack.c.h.b16 %v1019
    %v1131 = vunpack.c.l.b16 %v1020
    %v1132 = vunpack.c.l.b16 %v1021
    %v1133 = vunpack.c.h.b16 %v1021
    %v1134 = vunpack.c.l.b16 %v1022
    %v1135 = vunpack.c.l.b16 %v1023
    %v1136 = vunpack.c.h.b16 %v1023
    %v1137 = vunpack.c.l.b16 %v1024
    %v1138 = vunpack.c.l.b16 %v1025
    %v1139 = vunpack.c.h.b16 %v1025
    %v1140 = vunpack.c.l.b16 %v1026
    %v1141 = vunpack.c.l.b16 %v1027
    %v1142 = vunpack.c.h.b16 %v1027
    %v1143 = vunpack.c.l.b16 %v1028
    %v1144 = vunpack.c.l.b16 %v1029
    %v1145 = vunpack.c.h.b16 %v1029
    %v1146 = vunpack.c.l.b16 %v1030
    %v1147 = vunpack.c.l.b16 %v1031
    %v1148 = vunpack.c.h.b16 %v1031
    %v1149 = vunpack.c.l.b16 %v1032
    %v1150 = vunpack.c.l.b16 %v1033
    %v1151 = vunpack.c.h.b16 %v1033
    %v1152 = vunpack.c.l.b16 %v1034
    %v1153 = vunpack.c.l.b16 %v1035
    %v1154 = vunpack.c.h.b16 %v1035
    %v1155 = vunpack.c.l.b16 %v1036
    %v1156 = vpack.c.b16 %v1111, %v1108
    %v1157 = vpack.c.b16 %v1112, %v1109
    %v1158 = vpack.c.b16 %v1113, %v1110
    %v1159 = vpack.c.b16 %v1117, %v1114
    %v1160 = vpack.c.b16 %v1118, %v1115
    %v1161 = vpack.c.b16 %v1119, %v1116
    %v1162 = vpack.c.b16 %v1123, %v1120
    %v1163 = vpack.c.b16 %v1124, %v1121
    %v1164 = vpack.c.b16 %v1125, %v1122
    %v1165 = vpack.c.b16 %v1129, %v1126
    %v1166 = vpack.c.b16 %v1130, %v1127
    %v1167 = vpack.c.b16 %v1131, %v1128
    %v1168 = vpack.c.b16 %v1135, %v1132
    %v1169 = vpack.c.b16 %v1136, %v1133
    %v1170 = vpack.c.b16 %v1137, %v1134
    %v1171 = vpack.c.b16 %v1141, %v1138
    %v1172 = vpack.c.b16 %v1142, %v1139
    %v1173 = vpack.c.b16 %v1143, %v1140
    %v1174 = vpack.c.b16 %v1147, %v1144
    %v1175 = vpack.c.b16 %v1148, %v1145
    %v1176 = vpack.c.b16 %v1149, %v1146
    %v1177 = vpack.c.b16 %v1153, %v1150
    %v1178 = vpack.c.b16 %v1154, %v1151
    %v1179 = vpack.c.b16 %v1155, %v1152
    %1204 = vmatprep.subr.bf16.mxu0 %v1157
    %1205 = vmatpush1.bf16.msra.mxu0 %v1156
    %1206 = vmatprep.subr.bf16.mxu0 %v1160
    %1207 = vmatpush1.bf16.msra.mxu0 %v1159
    %1208 = vmatprep.subr.bf16.mxu0 %v1163
    %1209 = vmatpush1.bf16.msra.mxu0 %v1162
    %1210 = vmatprep.subr.bf16.mxu0 %v1166
    %1211 = vmatpush1.bf16.msra.mxu0 %v1165
    %1212 = vmatprep.subr.bf16.mxu0 %v1169
    %1213 = vmatpush1.bf16.msra.mxu0 %v1168
    %1214 = vmatprep.subr.bf16.mxu0 %v1172
    %1215 = vmatpush1.bf16.msra.mxu0 %v1171
    %1216 = vmatprep.subr.bf16.mxu0 %v1175
    %1217 = vmatpush1.bf16.msra.mxu0 %v1174
    %1218 = vmatprep.subr.bf16.mxu0 %v1178
    %1219 = vmatpush1.bf16.msra.mxu0 %v1177
    %1220 = vmatprep.subr.bf16.mxu0 0
    %1221 = vmatpush1.bf16.msra.mxu0 0
    %1222 = vmatprep.subr.bf16.mxu0 0
    %1223 = vmatpush1.bf16.msra.mxu0 0
    %1224 = vmatprep.subr.bf16.mxu0 0
    %1225 = vmatpush1.bf16.msra.mxu0 0
    %1226 = vmatprep.subr.bf16.mxu0 0
    %1227 = vmatpush1.bf16.msra.mxu0 0
    %1228 = vmatprep.subr.bf16.mxu0 0
    %1229 = vmatpush1.bf16.msra.mxu0 0
    %1230 = vmatprep.subr.bf16.mxu0 0
    %1231 = vmatpush1.bf16.msra.mxu0 0
    %1232 = vmatprep.subr.bf16.mxu0 0
    %1233 = vmatpush1.bf16.msra.mxu0 0
    %1234 = vmatprep.subr.bf16.mxu0 0
    %1235 = vmatpush1.bf16.msra.mxu0 0
    %1236 = vmatprep.mubr.bf16.mxu0 0
    %1237 = vmatmul.mubr.bf16.gmra.mrb[0].mxu0 %v1074
    %v1238 = vpop.f32.mrb[0].mxu0
    %v1239 = vadd.f32 0.0, %v1238
    %v1240 = vpop.f32.mrb[0].mxu0
    %v1241 = vadd.f32 0.0, %v1240
    %v1242 = vpop.f32.mrb[0].mxu0
    %v1243 = vpop.f32.mrb[0].mxu0
    %1244 = vdwg.mxu0
    %1245 = vmatprep.subr.bf16.mxu0 0
    %1246 = vmatpush1.bf16.msra.mxu0 %v1158
    %1247 = vmatprep.subr.bf16.mxu0 0
    %1248 = vmatpush1.bf16.msra.mxu0 %v1161
    %1249 = vmatprep.subr.bf16.mxu0 0
    %1250 = vmatpush1.bf16.msra.mxu0 %v1164
    %1251 = vmatprep.subr.bf16.mxu0 0
    %1252 = vmatpush1.bf16.msra.mxu0 %v1167
    %1253 = vmatprep.subr.bf16.mxu0 0
    %1254 = vmatpush1.bf16.msra.mxu0 %v1170
    %1255 = vmatprep.subr.bf16.mxu0 0
    %1256 = vmatpush1.bf16.msra.mxu0 %v1173
    %1257 = vmatprep.subr.bf16.mxu0 0
    %1258 = vmatpush1.bf16.msra.mxu0 %v1176
    %1259 = vmatprep.subr.bf16.mxu0 0
    %1260 = vmatpush1.bf16.msra.mxu0 %v1179
    %1261 = vmatprep.subr.bf16.mxu0 0
    %1262 = vmatpush1.bf16.msra.mxu0 0
    %1263 = vmatprep.subr.bf16.mxu0 0
    %1264 = vmatpush1.bf16.msra.mxu0 0
    %1265 = vmatprep.subr.bf16.mxu0 0
    %1266 = vmatpush1.bf16.msra.mxu0 0
    %1267 = vmatprep.subr.bf16.mxu0 0
    %1268 = vmatpush1.bf16.msra.mxu0 0
    %1269 = vmatprep.subr.bf16.mxu0 0
    %1270 = vmatpush1.bf16.msra.mxu0 0
    %1271 = vmatprep.subr.bf16.mxu0 0
    %1272 = vmatpush1.bf16.msra.mxu0 0
    %1273 = vmatprep.subr.bf16.mxu0 0
    %1274 = vmatpush1.bf16.msra.mxu0 0
    %1275 = vmatprep.subr.bf16.mxu0 0
    %1276 = vmatpush1.bf16.msra.mxu0 0
    %1277 = vmatprep.mubr.bf16.mxu0 0
    %1278 = vmatmul.mubr.bf16.gmra.mrb[0].mxu0 %v1074
    %v1279 = vpop.f32.mrb[0].mxu0
    %v1280 = vadd.f32 0.0, %v1279
    %v1281 = vpop.f32.mrb[0].mxu0
    %v1282 = vpop.f32.mrb[0].mxu0
    %v1283 = vpop.f32.mrb[0].mxu0
    %1284 = vdwg.mxu0
    %v1285 = vadd.f32 %v994, %v1239
    %v1286 = vadd.f32 %v995, %v1241
    %v1287 = vadd.f32 %v996, %v1280
    %v1288 = vld [vmem:[%s6] sm:$0x7]
    %v1290 = vlaneseq
    %v1291 = vshrl.u32 %v1290, 7
    %v1292 = vsub.s32 0, %v1291
    %v1293 = vrot.slane %v1288, %v1292
    %v1294 = vlaneseq
    %v1295 = vshrl.u32 %v1294, 7
    %v1296 = vsub.s32 1, %v1295
    %v1297 = vrot.slane %v1288, %v1296
    %v1298 = vlaneseq
    %v1299 = vshrl.u32 %v1298, 7
    %v1300 = vsub.s32 2, %v1299
    %v1301 = vrot.slane %v1288, %v1300
    %v1305 = vadd.f32 %v1285, %v1293
    %v1306 = vadd.f32 %v1286, %v1297
    %v1307 = vadd.f32 %v1287, %v1301
    %v1308 = vld [vmem:[#allocation7] sm:$0xff]
    %v1309 = vld [vmem:[#allocation7 + $0x8] sm:$0xf]
    %v1310 = vld [vmem:[#allocation7 + $0xc] sm:$0xff]
    %v1311 = vld [vmem:[#allocation7 + $0x14] sm:$0xf]
    %v1312 = vld [vmem:[#allocation7 + $0x18] sm:$0xff]
    %v1313 = vld [vmem:[#allocation7 + $0x20] sm:$0xf]
    %v1314 = vld [vmem:[#allocation7 + $0x24] sm:$0xff]
    %v1315 = vld [vmem:[#allocation7 + $0x2c] sm:$0xf]
    %v1316 = vld [vmem:[#allocation7 + $0x30] sm:$0xff]
    %v1317 = vld [vmem:[#allocation7 + $0x38] sm:$0xf]
    %v1318 = vld [vmem:[#allocation7 + $0x3c] sm:$0xff]
    %v1319 = vld [vmem:[#allocation7 + $0x44] sm:$0xf]
    %v1320 = vld [vmem:[#allocation7 + $0x48] sm:$0xff]
    %v1321 = vld [vmem:[#allocation7 + $0x50] sm:$0xf]
    %v1322 = vld [vmem:[#allocation7 + $0x54] sm:$0xff]
    %v1323 = vld [vmem:[#allocation7 + $0x5c] sm:$0xf]
    %v1324 = vld [vmem:[#allocation7 + $0x60] sm:$0xff]
    %v1325 = vld [vmem:[#allocation7 + $0x68] sm:$0xf]
    %v1326 = vld [vmem:[#allocation7 + $0x6c] sm:$0xff]
    %v1327 = vld [vmem:[#allocation7 + $0x74] sm:$0xf]
    %v1328 = vld [vmem:[#allocation7 + $0x78] sm:$0xff]
    %v1329 = vld [vmem:[#allocation7 + $0x80] sm:$0xf]
    %v1330 = vld [vmem:[#allocation7 + $0x84] sm:$0xff]
    %v1331 = vld [vmem:[#allocation7 + $0x8c] sm:$0xf]
    %v1332 = vld [vmem:[#allocation7 + $0x90] sm:$0xff]
    %v1333 = vld [vmem:[#allocation7 + $0x98] sm:$0xf]
    %v1334 = vld [vmem:[#allocation7 + $0x9c] sm:$0xff]
    %v1335 = vld [vmem:[#allocation7 + $0xa4] sm:$0xf]
    %v1336 = vld [vmem:[#allocation7 + $0xa8] sm:$0xff]
    %v1337 = vld [vmem:[#allocation7 + $0xb0] sm:$0xf]
    %v1338 = vld [vmem:[#allocation7 + $0xb4] sm:$0xff]
    %v1339 = vld [vmem:[#allocation7 + $0xbc] sm:$0xf]
    %v1340 = vld [vmem:[%s7] sm:$0x7]
    %v1342 = vlaneseq
    %v1343 = vshrl.u32 %v1342, 7
    %v1344 = vsub.s32 0, %v1343
    %v1345 = vrot.slane %v1340, %v1344
    %v1346 = vlaneseq
    %v1347 = vshrl.u32 %v1346, 7
    %v1348 = vsub.s32 1, %v1347
    %v1349 = vrot.slane %v1340, %v1348
    %v1350 = vlaneseq
    %v1351 = vshrl.u32 %v1350, 7
    %v1352 = vsub.s32 2, %v1351
    %v1353 = vrot.slane %v1340, %v1352
    %v1389 = vunpack.c.l.b16 %v1308
    %v1390 = vunpack.c.h.b16 %v1308
    %v1391 = vunpack.c.l.b16 %v1309
    %v1392 = vunpack.c.l.b16 %v1310
    %v1393 = vunpack.c.h.b16 %v1310
    %v1394 = vunpack.c.l.b16 %v1311
    %v1395 = vunpack.c.l.b16 %v1312
    %v1396 = vunpack.c.h.b16 %v1312
    %v1397 = vunpack.c.l.b16 %v1313
    %v1398 = vunpack.c.l.b16 %v1314
    %v1399 = vunpack.c.h.b16 %v1314
    %v1400 = vunpack.c.l.b16 %v1315
    %v1401 = vunpack.c.l.b16 %v1316
    %v1402 = vunpack.c.h.b16 %v1316
    %v1403 = vunpack.c.l.b16 %v1317
    %v1404 = vunpack.c.l.b16 %v1318
    %v1405 = vunpack.c.h.b16 %v1318
    %v1406 = vunpack.c.l.b16 %v1319
    %v1407 = vunpack.c.l.b16 %v1320
    %v1408 = vunpack.c.h.b16 %v1320
    %v1409 = vunpack.c.l.b16 %v1321
    %v1410 = vunpack.c.l.b16 %v1322
    %v1411 = vunpack.c.h.b16 %v1322
    %v1412 = vunpack.c.l.b16 %v1323
    %v1413 = vunpack.c.l.b16 %v1324
    %v1414 = vunpack.c.h.b16 %v1324
    %v1415 = vunpack.c.l.b16 %v1325
    %v1416 = vunpack.c.l.b16 %v1326
    %v1417 = vunpack.c.h.b16 %v1326
    %v1418 = vunpack.c.l.b16 %v1327
    %v1419 = vunpack.c.l.b16 %v1328
    %v1420 = vunpack.c.h.b16 %v1328
    %v1421 = vunpack.c.l.b16 %v1329
    %v1422 = vunpack.c.l.b16 %v1330
    %v1423 = vunpack.c.h.b16 %v1330
    %v1424 = vunpack.c.l.b16 %v1331
    %v1425 = vunpack.c.l.b16 %v1332
    %v1426 = vunpack.c.h.b16 %v1332
    %v1427 = vunpack.c.l.b16 %v1333
    %v1428 = vunpack.c.l.b16 %v1334
    %v1429 = vunpack.c.h.b16 %v1334
    %v1430 = vunpack.c.l.b16 %v1335
    %v1431 = vunpack.c.l.b16 %v1336
    %v1432 = vunpack.c.h.b16 %v1336
    %v1433 = vunpack.c.l.b16 %v1337
    %v1434 = vunpack.c.l.b16 %v1338
    %v1435 = vunpack.c.h.b16 %v1338
    %v1436 = vunpack.c.l.b16 %v1339
    %v1437 = vpack.c.b16 %v1392, %v1389
    %v1438 = vpack.c.b16 %v1393, %v1390
    %v1439 = vpack.c.b16 %v1394, %v1391
    %v1440 = vpack.c.b16 %v1398, %v1395
    %v1441 = vpack.c.b16 %v1399, %v1396
    %v1442 = vpack.c.b16 %v1400, %v1397
    %v1443 = vpack.c.b16 %v1404, %v1401
    %v1444 = vpack.c.b16 %v1405, %v1402
    %v1445 = vpack.c.b16 %v1406, %v1403
    %v1446 = vpack.c.b16 %v1410, %v1407
    %v1447 = vpack.c.b16 %v1411, %v1408
    %v1448 = vpack.c.b16 %v1412, %v1409
    %v1449 = vpack.c.b16 %v1416, %v1413
    %v1450 = vpack.c.b16 %v1417, %v1414
    %v1451 = vpack.c.b16 %v1418, %v1415
    %v1452 = vpack.c.b16 %v1422, %v1419
    %v1453 = vpack.c.b16 %v1423, %v1420
    %v1454 = vpack.c.b16 %v1424, %v1421
    %v1455 = vpack.c.b16 %v1428, %v1425
    %v1456 = vpack.c.b16 %v1429, %v1426
    %v1457 = vpack.c.b16 %v1430, %v1427
    %v1458 = vpack.c.b16 %v1434, %v1431
    %v1459 = vpack.c.b16 %v1435, %v1432
    %v1460 = vpack.c.b16 %v1436, %v1433
    %1485 = vmatprep.subr.bf16.mxu0 %v1438
    %1486 = vmatpush1.bf16.msra.mxu0 %v1437
    %1487 = vmatprep.subr.bf16.mxu0 %v1441
    %1488 = vmatpush1.bf16.msra.mxu0 %v1440
    %1489 = vmatprep.subr.bf16.mxu0 %v1444
    %1490 = vmatpush1.bf16.msra.mxu0 %v1443
    %1491 = vmatprep.subr.bf16.mxu0 %v1447
    %1492 = vmatpush1.bf16.msra.mxu0 %v1446
    %1493 = vmatprep.subr.bf16.mxu0 %v1450
    %1494 = vmatpush1.bf16.msra.mxu0 %v1449
    %1495 = vmatprep.subr.bf16.mxu0 %v1453
    %1496 = vmatpush1.bf16.msra.mxu0 %v1452
    %1497 = vmatprep.subr.bf16.mxu0 %v1456
    %1498 = vmatpush1.bf16.msra.mxu0 %v1455
    %1499 = vmatprep.subr.bf16.mxu0 %v1459
    %1500 = vmatpush1.bf16.msra.mxu0 %v1458
    %1501 = vmatprep.subr.bf16.mxu0 0
    %1502 = vmatpush1.bf16.msra.mxu0 0
    %1503 = vmatprep.subr.bf16.mxu0 0
    %1504 = vmatpush1.bf16.msra.mxu0 0
    %1505 = vmatprep.subr.bf16.mxu0 0
    %1506 = vmatpush1.bf16.msra.mxu0 0
    %1507 = vmatprep.subr.bf16.mxu0 0
    %1508 = vmatpush1.bf16.msra.mxu0 0
    %1509 = vmatprep.subr.bf16.mxu0 0
    %1510 = vmatpush1.bf16.msra.mxu0 0
    %1511 = vmatprep.subr.bf16.mxu0 0
    %1512 = vmatpush1.bf16.msra.mxu0 0
    %1513 = vmatprep.subr.bf16.mxu0 0
    %1514 = vmatpush1.bf16.msra.mxu0 0
    %1515 = vmatprep.subr.bf16.mxu0 0
    %1516 = vmatpush1.bf16.msra.mxu0 0
    %1517 = vmatprep.mubr.bf16.mxu0 0
    %1518 = vmatmul.mubr.bf16.gmra.mrb[0].mxu0 %v94
    %v1519 = vpop.f32.mrb[0].mxu0
    %v1520 = vadd.f32 %v1345, %v1519
    %v1521 = vpop.f32.mrb[0].mxu0
    %v1522 = vadd.f32 %v1349, %v1521
    %v1523 = vpop.f32.mrb[0].mxu0
    %v1524 = vpop.f32.mrb[0].mxu0
    %1525 = vdwg.mxu0
    %1526 = vmatprep.subr.bf16.mxu0 0
    %1527 = vmatpush1.bf16.msra.mxu0 %v1439
    %1528 = vmatprep.subr.bf16.mxu0 0
    %1529 = vmatpush1.bf16.msra.mxu0 %v1442
    %1530 = vmatprep.subr.bf16.mxu0 0
    %1531 = vmatpush1.bf16.msra.mxu0 %v1445
    %1532 = vmatprep.subr.bf16.mxu0 0
    %1533 = vmatpush1.bf16.msra.mxu0 %v1448
    %1534 = vmatprep.subr.bf16.mxu0 0
    %1535 = vmatpush1.bf16.msra.mxu0 %v1451
    %1536 = vmatprep.subr.bf16.mxu0 0
    %1537 = vmatpush1.bf16.msra.mxu0 %v1454
    %1538 = vmatprep.subr.bf16.mxu0 0
    %1539 = vmatpush1.bf16.msra.mxu0 %v1457
    %1540 = vmatprep.subr.bf16.mxu0 0
    %1541 = vmatpush1.bf16.msra.mxu0 %v1460
    %1542 = vmatprep.subr.bf16.mxu0 0
    %1543 = vmatpush1.bf16.msra.mxu0 0
    %1544 = vmatprep.subr.bf16.mxu0 0
    %1545 = vmatpush1.bf16.msra.mxu0 0
    %1546 = vmatprep.subr.bf16.mxu0 0
    %1547 = vmatpush1.bf16.msra.mxu0 0
    %1548 = vmatprep.subr.bf16.mxu0 0
    %1549 = vmatpush1.bf16.msra.mxu0 0
    %1550 = vmatprep.subr.bf16.mxu0 0
    %1551 = vmatpush1.bf16.msra.mxu0 0
    %1552 = vmatprep.subr.bf16.mxu0 0
    %1553 = vmatpush1.bf16.msra.mxu0 0
    %1554 = vmatprep.subr.bf16.mxu0 0
    %1555 = vmatpush1.bf16.msra.mxu0 0
    %1556 = vmatprep.subr.bf16.mxu0 0
    %1557 = vmatpush1.bf16.msra.mxu0 0
    %1558 = vmatprep.mubr.bf16.mxu0 0
    %1559 = vmatmul.mubr.bf16.gmra.mrb[0].mxu0 %v94
    %v1560 = vpop.f32.mrb[0].mxu0
    %v1561 = vadd.f32 %v1353, %v1560
    %v1562 = vpop.f32.mrb[0].mxu0
    %v1563 = vpop.f32.mrb[0].mxu0
    %v1564 = vpop.f32.mrb[0].mxu0
    %1565 = vdwg.mxu0
    %v1566 = vadd.f32 %v1305, %v1520
    %v1567 = vxor.u32 %v1566, 2147483648
    %v1568 = vmul.f32 %v1567, 1.442695
    %v1569 = vpow.pop %v1568
    %v1570 = vadd.f32 %v1569, 1.0
    %v1571 = vrcp.pop %v1570
    %v1572 = vmul.f32 1.0, %v1571
    %v1573 = vadd.f32 %v1306, %v1522
    %v1574 = vxor.u32 %v1573, 2147483648
    %v1575 = vmul.f32 %v1574, 1.442695
    %v1576 = vpow.pop %v1575
    %v1577 = vadd.f32 %v1576, 1.0
    %v1578 = vrcp.pop %v1577
    %v1579 = vmul.f32 1.0, %v1578
    %v1580 = vmul.f32 %v1572, %v1561
    %v1581 = vadd.f32 %v1307, %v1580
    %v1582 = vtanh.pop %v1581
    %v1583 = vsub.f32 1.0, %v1579
    %v1584 = vmul.f32 %v1583, %v1582
    %v1585 = vmul.f32 %v1579, %v93
    %v1586 = vadd.f32 %v1584, %v1585
    %v1587 = vpack.c.bf16 %v1586, %v1586
    %v1588 = vld [vmem:[#allocation8] sm:$0xf]
    %v1589 = vld [vmem:[#allocation8 + $0x4] sm:$0xf]
    %v1590 = vld [vmem:[#allocation8 + $0x8] sm:$0xf]
    %v1591 = vld [vmem:[#allocation8 + $0xc] sm:$0xf]
    %v1592 = vld [vmem:[#allocation8 + $0x10] sm:$0xf]
    %v1593 = vld [vmem:[#allocation8 + $0x14] sm:$0xf]
    %v1594 = vld [vmem:[#allocation8 + $0x18] sm:$0xf]
    %v1595 = vld [vmem:[#allocation8 + $0x1c] sm:$0xf]
    %v1596 = vld [vmem:[#allocation8 + $0x20] sm:$0xf]
    %v1597 = vld [vmem:[#allocation8 + $0x24] sm:$0xf]
    %v1598 = vld [vmem:[#allocation8 + $0x28] sm:$0xf]
    %v1599 = vld [vmem:[#allocation8 + $0x2c] sm:$0xf]
    %v1600 = vld [vmem:[#allocation8 + $0x30] sm:$0xf]
    %v1601 = vld [vmem:[#allocation8 + $0x34] sm:$0xf]
    %v1602 = vld [vmem:[#allocation8 + $0x38] sm:$0xf]
    %v1603 = vld [vmem:[#allocation8 + $0x3c] sm:$0xf]
    %v1604 = vld [vmem:[%s9] sm:$0x1]
    %v1606 = vlaneseq
    %v1607 = vshrl.u32 %v1606, 7
    %v1608 = vsub.s32 0, %v1607
    %v1609 = vrot.slane %v1604, %v1608
    %v1627 = vunpack.c.l.b16 %v1588
    %v1628 = vunpack.c.l.b16 %v1589
    %v1629 = vunpack.c.l.b16 %v1590
    %v1630 = vunpack.c.l.b16 %v1591
    %v1631 = vunpack.c.l.b16 %v1592
    %v1632 = vunpack.c.l.b16 %v1593
    %v1633 = vunpack.c.l.b16 %v1594
    %v1634 = vunpack.c.l.b16 %v1595
    %v1635 = vunpack.c.l.b16 %v1596
    %v1636 = vunpack.c.l.b16 %v1597
    %v1637 = vunpack.c.l.b16 %v1598
    %v1638 = vunpack.c.l.b16 %v1599
    %v1639 = vunpack.c.l.b16 %v1600
    %v1640 = vunpack.c.l.b16 %v1601
    %v1641 = vunpack.c.l.b16 %v1602
    %v1642 = vunpack.c.l.b16 %v1603
    %v1643 = vpack.c.b16 %v1628, %v1627
    %v1644 = vpack.c.b16 %v1630, %v1629
    %v1645 = vpack.c.b16 %v1632, %v1631
    %v1646 = vpack.c.b16 %v1634, %v1633
    %v1647 = vpack.c.b16 %v1636, %v1635
    %v1648 = vpack.c.b16 %v1638, %v1637
    %v1649 = vpack.c.b16 %v1640, %v1639
    %v1650 = vpack.c.b16 %v1642, %v1641
    %1659 = vmatprep.subr.bf16.mxu0 0
    %1660 = vmatpush1.bf16.msra.mxu0 %v1643
    %1661 = vmatprep.subr.bf16.mxu0 0
    %1662 = vmatpush1.bf16.msra.mxu0 %v1644
    %1663 = vmatprep.subr.bf16.mxu0 0
    %1664 = vmatpush1.bf16.msra.mxu0 %v1645
    %1665 = vmatprep.subr.bf16.mxu0 0
    %1666 = vmatpush1.bf16.msra.mxu0 %v1646
    %1667 = vmatprep.subr.bf16.mxu0 0
    %1668 = vmatpush1.bf16.msra.mxu0 %v1647
    %1669 = vmatprep.subr.bf16.mxu0 0
    %1670 = vmatpush1.bf16.msra.mxu0 %v1648
    %1671 = vmatprep.subr.bf16.mxu0 0
    %1672 = vmatpush1.bf16.msra.mxu0 %v1649
    %1673 = vmatprep.subr.bf16.mxu0 0
    %1674 = vmatpush1.bf16.msra.mxu0 %v1650
    %1675 = vmatprep.subr.bf16.mxu0 0
    %1676 = vmatpush1.bf16.msra.mxu0 0
    %1677 = vmatprep.subr.bf16.mxu0 0
    %1678 = vmatpush1.bf16.msra.mxu0 0
    %1679 = vmatprep.subr.bf16.mxu0 0
    %1680 = vmatpush1.bf16.msra.mxu0 0
    %1681 = vmatprep.subr.bf16.mxu0 0
    %1682 = vmatpush1.bf16.msra.mxu0 0
    %1683 = vmatprep.subr.bf16.mxu0 0
    %1684 = vmatpush1.bf16.msra.mxu0 0
    %1685 = vmatprep.subr.bf16.mxu0 0
    %1686 = vmatpush1.bf16.msra.mxu0 0
    %1687 = vmatprep.subr.bf16.mxu0 0
    %1688 = vmatpush1.bf16.msra.mxu0 0
    %1689 = vmatprep.subr.bf16.mxu0 0
    %1690 = vmatpush1.bf16.msra.mxu0 0
    %1691 = vmatprep.mubr.bf16.mxu0 0
    %1692 = vmatmul.mubr.bf16.gmra.mrb[0].mxu0 %v1587
    %v1693 = vpop.f32.mrb[0].mxu0
    %v1694 = vadd.f32 %v1609, %v1693
    %v1695 = vpop.f32.mrb[0].mxu0
    %v1696 = vpop.f32.mrb[0].mxu0
    %v1697 = vpop.f32.mrb[0].mxu0
    %1698 = vdwg.mxu0
    %1699 = vmax.xlane.f32.xlu0 %v1694
    %v1700 = vpop.xlane.xlu0 %1699
    %v1701 = vsub.f32 %v1694, %v1700
    %v1702 = vmul.f32 %v1701, 1.442695
    %v1703 = vpow.pop %v1702
    %1704 = vadd.xlane.f32.xlu0 %v1703
    %v1705 = vpop.xlane.xlu0 %1704
    %v1706 = vlog2.pop %v1705
    %v1707 = vmul.f32 %v1706, 0.6931472
    %v1708 = vadd.f32 %v1707, %v1700
    %v1709 = vsub.f32 %v1694, %v1708
    %1710 = vst [vmem:[#allocation10] sm:$0xff] %v1709
    %1711 = vst [vmem:[#allocation11] sm:$0xff] %v1586
    // Predicated region
    $region58: #{tpu_custom_call.1} parent=1 // pred_check
      _
    $region59: #{tpu_custom_call.1} parent=1 // pred_check_branch
      %1713 = sbr.rel (0) target = $region61
    $region60: #{tpu_custom_call.1} parent=1 // pred_region
      %s1715 = ssub.s32 128, 128
      %1716 = vsyncadd [#allocation4], %s1715
      %s1718 = sshll.u32 [#allocation10], 4
      %s1719 = int_to_ptr.vmem [resolvable:$true] %s1718
      %1721 = dma.vmem_to_hbm [thread:$0]  %s1719, 128, %s10, [#allocation4]
    $region61: #{tpu_custom_call.1} parent=1 // pred_fallthru
      _
    // Predicated region
    $region62: #{tpu_custom_call.1} parent=1 // pred_check
      _
    $region63: #{tpu_custom_call.1} parent=1 // pred_check_branch
      %1723 = sbr.rel (0) target = $region65
    $region64: #{tpu_custom_call.1} parent=1 // pred_region
      %s1725 = ssub.s32 128, 128
      %1726 = vsyncadd [#allocation12], %s1725
      %s1728 = sshll.u32 [#allocation11], 4
      %s1729 = int_to_ptr.vmem [resolvable:$true] %s1728
      %1731 = dma.vmem_to_hbm [thread:$0]  %s1729, 128, %s11, [#allocation12]
    $region65: #{tpu_custom_call.1} parent=1 // pred_fallthru
      _
    // Predicated region
    $region66: #{tpu_custom_call.1} parent=1 // pred_check
      _
    $region67: #{tpu_custom_call.1} parent=1 // pred_check_branch
      %1733 = sbr.rel (0) target = $region69
    $region68: #{tpu_custom_call.1} parent=1 // pred_region
      %1734 = dma.done [#allocation4], 128
    $region69: #{tpu_custom_call.1} parent=1 // pred_fallthru
      _
    // Predicated region
    $region70: #{tpu_custom_call.1} parent=1 // pred_check
      _
    $region71: #{tpu_custom_call.1} parent=1 // pred_check_branch
      %1736 = sbr.rel (0) target = $region73
    $region72: #{tpu_custom_call.1} parent=1 // pred_region
      %1737 = dma.done [#allocation12], 128
    $region73: #{tpu_custom_call.1} parent=1 // pred_fallthru
      _
    %1738 = vsyncpa [#allocation3], 1
    %1739 = vsyncpa [#allocation6], 1
    %1740 = vsyncpa [#allocation9], 1
    %1741 = vsyncpa [#allocation4], 1
    %1742 = vsyncpa [#allocation12], 1

</llo_original>
